<compile_context>
chip_gen: v6e
topology: v6e:2x2x1
jax: 0.10.0
libtpu: 0.0.40
codegen_flags: <defaults>
</compile_context>

<pallas_src>
import jax
import jax.numpy as jnp
from jax.experimental import pallas as pl
from jax.experimental.pallas import tpu as pltpu


def _gelu_tanh(x):
    # tanh-approximation GELU (tanh lowers to the EUP slot on TPU)
    c = 0.7978845608028654  # sqrt(2/pi)
    return 0.5 * x * (1.0 + jnp.tanh(c * (x + 0.044715 * x * x * x)))


def mixed_op_kernel(probs_ref, x_ref, w1_ref, b1_ref, w2_ref, b2_ref, o_ref):
    """One row-tile of the softmax(alpha)-weighted mixture of candidate ops.

    probs_ref : SMEM (2,) f32   [p0, p2]  (p1 is folded into w2/b2)
    x_ref     : VMEM (TM, H)
    w1_ref    : VMEM (H, HF)  bf16 (resident, single-buffered)
    b1_ref    : VMEM (1, HF)  f32
    w2_ref    : VMEM (HF, H)  bf16 (already scaled by p1)
    b2_ref    : VMEM (1, H)   f32  (already scaled by p1)
    o_ref     : VMEM (TM, H)
    """
    x32 = x_ref[...].astype(jnp.float32)     # identity / GELU path (f32 VPU + EUP)
    x_mm = x_ref[...].astype(jnp.bfloat16)   # MXU path: bf16 in, f32 accumulate

    # candidate op 1: position-wise FFN (MXU matmuls, the hot path).
    # p1 is pre-folded into w2/b2 by the wrapper -> no mixture multiply here.
    h = jnp.dot(x_mm, w1_ref[...], preferred_element_type=jnp.float32) + b1_ref[...]
    h = jnp.maximum(h, 0.0)
    op1_scaled = (
        jnp.dot(h.astype(jnp.bfloat16), w2_ref[...],
                preferred_element_type=jnp.float32) + b2_ref[...])

    # candidate op 0: identity / skip; candidate op 2: elementwise GELU
    p0 = probs_ref[0]
    p2 = probs_ref[1]
    o_ref[...] = (p0 * x32 + op1_scaled + p2 * _gelu_tanh(x32)).astype(o_ref.dtype)


def _prepare_params(alpha, w1, b1, w2, b2):
    """softmax(alpha) + dtype prep; folds p1 into the FFN output weights."""
    probs = jax.nn.softmax(alpha.astype(jnp.float32), axis=0)
    p0, p1, p2 = probs[0], probs[1], probs[2]
    w1b = w1.astype(jnp.bfloat16)
    b1f = b1.astype(jnp.float32)
    # one-time O(HF*H) scale on the weights (NOT an activation pre-scale)
    w2b = (w2.astype(jnp.float32) * p1).astype(jnp.bfloat16)
    b2f = b2.astype(jnp.float32) * p1
    p02 = jnp.stack([p0, p2]).astype(jnp.float32)
    return p02, w1b, b1f, w2b, b2f


def _round_up(x, m):
    return ((x + m - 1) // m) * m


def _choose_tm(n_rows, tm_max):
    """Row tile: multiple of 8 (sublane), large (mem-bound), and with >=2 grid
    steps when possible so the 'parallel' axis can shard across v7x's 2 TCs."""
    tm = max(8, min((tm_max // 8) * 8, _round_up(n_rows, 8)))
    if pl.cdiv(n_rows, tm) < 2 and tm > 8:
        half = max(8, _round_up(tm // 2, 8))
        if pl.cdiv(n_rows, half) >= 2:
            tm = half
    return tm


def _vmem_limit_bytes(tm, H, HF, x_itemsize, out_itemsize):
    """Right-sized VMEM request (never the full 64 MiB of a v7x TensorCore)."""
    x_bytes = 2 * tm * H * x_itemsize                 # double-buffered x tile
    out_bytes = 2 * tm * H * out_itemsize             # double-buffered out tile
    w_bytes = (H * HF + HF * H) * 2 + (HF + H) * 4    # single-buffered weights/biases
    work = tm * HF * (4 + 2) + tm * H * 8             # f32 h + bf16 h + x casts / temps
    need = x_bytes + out_bytes + w_bytes + work
    return int(min(max(2 * need, 16 * 1024 * 1024), 48 * 1024 * 1024))


def _build_call(n_rows, H, HF, tm, out_dtype, vmem_limit, cost, single_buffer_consts):
    const_kw = dict(pipeline_mode=pl.Buffered(1)) if single_buffer_consts else {}
    in_specs = [
        pl.BlockSpec(memory_space=pltpu.MemorySpace.SMEM),     # [p0, p2] scalars
        pl.BlockSpec((tm, H), lambda i: (i, 0)),               # x row tile
        pl.BlockSpec((H, HF), lambda i: (0, 0), **const_kw),   # w1 (bf16, resident)
        pl.BlockSpec((1, HF), lambda i: (0, 0), **const_kw),   # b1
        pl.BlockSpec((HF, H), lambda i: (0, 0), **const_kw),   # w2 * p1 (bf16, resident)
        pl.BlockSpec((1, H), lambda i: (0, 0), **const_kw),    # b2 * p1
    ]
    return pl.pallas_call(
        mixed_op_kernel,
        out_shape=jax.ShapeDtypeStruct((n_rows, H), out_dtype),
        grid=(pl.cdiv(n_rows, tm),),                 # partial last block is write-masked
        in_specs=in_specs,
        out_specs=pl.BlockSpec((tm, H), lambda i: (i, 0)),
        compiler_params=pltpu.CompilerParams(
            dimension_semantics=("parallel",),
            vmem_limit_bytes=vmem_limit),
        cost_estimate=cost,
    )


def mixed_op_forward(x, alpha, w1, b1, w2, b2, *, tm=512, out_dtype=None):
    """MixedOp.forward(x): softmax(alpha)-weighted sum of candidate ops."""
    B, S, H = x.shape
    HF = w1.shape[1]
    n_rows = B * S
    out_dtype = jnp.dtype(x.dtype if out_dtype is None else out_dtype)

    p02, w1b, b1f, w2b, b2f = _prepare_params(alpha, w1, b1, w2, b2)
    xf = x.reshape(n_rows, H)                        # no padding pass; grid masks tail

    tm = _choose_tm(n_rows, tm)
    vmem_limit = _vmem_limit_bytes(tm, H, HF, x.dtype.itemsize, out_dtype.itemsize)

    cost = pl.CostEstimate(
        flops=4 * n_rows * H * HF + 12 * n_rows * H,
        transcendentals=n_rows * H,
        bytes_accessed=(n_rows * H * (x.dtype.itemsize + out_dtype.itemsize)
                        + (H * HF + HF * H) * 2 + (HF + H) * 4),
    )

    args = (p02, xf, w1b, b1f, w2b, b2f)
    try:
        out = _build_call(n_rows, H, HF, tm, out_dtype, vmem_limit, cost,
                          single_buffer_consts=True)(*args)
    except Exception:
        # Fallback for JAX versions without BlockSpec(pipeline_mode=...):
        # default (double-buffered) constant blocks, otherwise identical.
        out = _build_call(n_rows, H, HF, tm, out_dtype, vmem_limit, cost,
                          single_buffer_consts=False)(*args)

    return out.reshape(B, S, H)


def mixed_op_reference(x, alpha, w1, b1, w2, b2):
    """Pure-JAX reference with the same dtype/folding choices as the kernel."""
    p02, w1b, b1f, w2b, b2f = _prepare_params(alpha, w1, b1, w2, b2)
    x32 = x.astype(jnp.float32)
    xb = x.astype(jnp.bfloat16)
    h = jnp.maximum(
        jnp.einsum("bsh,hf->bsf", xb, w1b,
                   preferred_element_type=jnp.float32) + b1f[0], 0.0)
    op1s = jnp.einsum("bsf,fh->bsh", h.astype(jnp.bfloat16), w2b,
                      preferred_element_type=jnp.float32) + b2f[0]
    return p02[0] * x32 + op1s + p02[1] * _gelu_tanh(x32)


if __name__ == "__main__":
    # Small but lane-dense shapes (H, HF multiples of 128).
    B, S, H, HF = 2, 8, 128, 256
    key = jax.random.PRNGKey(0)
    k_x, k_a, k_w1, k_b1, k_w2, k_b2 = jax.random.split(key, 6)

    x = jax.random.normal(k_x, (B, S, H), dtype=jnp.float32)
    # alpha_prob = nn.Parameter(torch.randn(n_choices)) -> deterministic randn
    alpha = jax.random.normal(k_a, (3,), dtype=jnp.float32)
    w1 = jax.random.normal(k_w1, (H, HF), dtype=jnp.float32) * 0.1
    b1 = jax.random.normal(k_b1, (1, HF), dtype=jnp.float32) * 0.1
    w2 = jax.random.normal(k_w2, (HF, H), dtype=jnp.float32) * 0.1
    b2 = jax.random.normal(k_b2, (1, H), dtype=jnp.float32) * 0.1

    out = mixed_op_forward(x, alpha, w1, b1, w2, b2)
    out = jax.block_until_ready(out)

    ref = mixed_op_reference(x, alpha, w1, b1, w2, b2)
    assert out.shape == (B, S, H)
    assert jnp.allclose(out, ref, atol=1e-3, rtol=1e-3), "mismatch vs reference"

    print("KERNEL_OK")
</pallas_src>

<mosaic_0001>
module attributes {stable_mosaic.version = 11 : i64} {
  func.func @mixed_op_kernel(%arg0: i32, %arg1: memref<2xf32, #tpu.memory_space<smem>>, %arg2: memref<8x128xf32, #tpu.memory_space<vmem>>, %arg3: memref<128x256xbf16, #tpu.memory_space<vmem>>, %arg4: memref<1x256xf32, #tpu.memory_space<vmem>>, %arg5: memref<256x128xbf16, #tpu.memory_space<vmem>>, %arg6: memref<1x128xf32, #tpu.memory_space<vmem>>, %arg7: memref<8x128xf32, #tpu.memory_space<vmem>>) attributes {dimension_semantics = [#tpu.dimension_semantics<parallel>], iteration_bounds = array<i64: 2>, scalar_prefetch = 0 : i64, scratch_operands = 0 : i64, tpu.core_type = #tpu.core_type<tc>, window_params = [{transform_indices = @transform_0, window_bounds = array<i64: 2>}, {transform_indices = @transform_1, window_bounds = array<i64: 8, 128>}, {pipeline_mode = #tpu.pipeline_mode<synchronous>, transform_indices = @transform_2, window_bounds = array<i64: 128, 256>}, {pipeline_mode = #tpu.pipeline_mode<synchronous>, transform_indices = @transform_3, window_bounds = array<i64: 1, 256>}, {pipeline_mode = #tpu.pipeline_mode<synchronous>, transform_indices = @transform_4, window_bounds = array<i64: 256, 128>}, {pipeline_mode = #tpu.pipeline_mode<synchronous>, transform_indices = @transform_5, window_bounds = array<i64: 1, 128>}, {transform_indices = @transform_6, window_bounds = array<i64: 8, 128>}]} {
    %c0 = arith.constant 0 : index
    %c0_0 = arith.constant 0 : index
    %0 = vector.load %arg2[%c0, %c0_0] : memref<8x128xf32, #tpu.memory_space<vmem>>, vector<8x128xf32>
    %c0_1 = arith.constant 0 : index
    %c0_2 = arith.constant 0 : index
    %1 = vector.load %arg2[%c0_1, %c0_2] : memref<8x128xf32, #tpu.memory_space<vmem>>, vector<8x128xf32>
    %2 = arith.truncf %1 : vector<8x128xf32> to vector<8x128xbf16>
    %c0_3 = arith.constant 0 : index
    %c0_4 = arith.constant 0 : index
    %3 = vector.load %arg3[%c0_3, %c0_4] : memref<128x256xbf16, #tpu.memory_space<vmem>>, vector<128x256xbf16>
    %cst = arith.constant dense<0.000000e+00> : vector<8x256xf32>
    %4 = tpu.matmul %2, %3, %cst {dimension_numbers = #tpu.dot_dimension_numbers<[1], [0], [0], [1], [0, 0, 1, 1], [], []>} : vector<8x128xbf16>, vector<128x256xbf16>, vector<8x256xf32> -> vector<8x256xf32>
    %c0_5 = arith.constant 0 : index
    %c0_6 = arith.constant 0 : index
    %5 = vector.load %arg4[%c0_5, %c0_6] : memref<1x256xf32, #tpu.memory_space<vmem>>, vector<1x256xf32>
    %6 = vector.broadcast %5 : vector<1x256xf32> to vector<8x256xf32>
    %7 = arith.addf %4, %6 : vector<8x256xf32>
    %cst_7 = arith.constant 0.000000e+00 : f32
    %8 = vector.broadcast %cst_7 : f32 to vector<8x256xf32>
    %9 = arith.maximumf %7, %8 : vector<8x256xf32>
    %10 = arith.truncf %9 : vector<8x256xf32> to vector<8x256xbf16>
    %c0_8 = arith.constant 0 : index
    %c0_9 = arith.constant 0 : index
    %11 = vector.load %arg5[%c0_8, %c0_9] : memref<256x128xbf16, #tpu.memory_space<vmem>>, vector<256x128xbf16>
    %cst_10 = arith.constant dense<0.000000e+00> : vector<8x128xf32>
    %12 = tpu.matmul %10, %11, %cst_10 {dimension_numbers = #tpu.dot_dimension_numbers<[1], [0], [0], [1], [0, 0, 1, 1], [], []>} : vector<8x256xbf16>, vector<256x128xbf16>, vector<8x128xf32> -> vector<8x128xf32>
    %c0_11 = arith.constant 0 : index
    %c0_12 = arith.constant 0 : index
    %13 = vector.load %arg6[%c0_11, %c0_12] : memref<1x128xf32, #tpu.memory_space<vmem>>, vector<1x128xf32>
    %14 = vector.broadcast %13 : vector<1x128xf32> to vector<8x128xf32>
    %15 = arith.addf %12, %14 : vector<8x128xf32>
    %c0_13 = arith.constant 0 : index
    %16 = memref.load %arg1[%c0_13] : memref<2xf32, #tpu.memory_space<smem>>
    %c1 = arith.constant 1 : index
    %17 = memref.load %arg1[%c1] : memref<2xf32, #tpu.memory_space<smem>>
    %18 = vector.broadcast %16 : f32 to vector<8x128xf32>
    %19 = arith.mulf %18, %0 : vector<8x128xf32>
    %20 = arith.addf %19, %15 : vector<8x128xf32>
    %cst_14 = arith.constant 5.000000e-01 : f32
    %21 = vector.broadcast %cst_14 : f32 to vector<8x128xf32>
    %22 = arith.mulf %21, %0 : vector<8x128xf32>
    %cst_15 = arith.constant 4.471500e-02 : f32
    %23 = vector.broadcast %cst_15 : f32 to vector<8x128xf32>
    %24 = arith.mulf %23, %0 : vector<8x128xf32>
    %25 = arith.mulf %24, %0 : vector<8x128xf32>
    %26 = arith.mulf %25, %0 : vector<8x128xf32>
    %27 = arith.addf %0, %26 : vector<8x128xf32>
    %cst_16 = arith.constant 0.797884583 : f32
    %28 = vector.broadcast %cst_16 : f32 to vector<8x128xf32>
    %29 = arith.mulf %28, %27 : vector<8x128xf32>
    %30 = math.tanh %29 : vector<8x128xf32>
    %cst_17 = arith.constant 1.000000e+00 : f32
    %31 = vector.broadcast %cst_17 : f32 to vector<8x128xf32>
    %32 = arith.addf %31, %30 : vector<8x128xf32>
    %33 = arith.mulf %22, %32 : vector<8x128xf32>
    %34 = vector.broadcast %17 : f32 to vector<8x128xf32>
    %35 = arith.mulf %34, %33 : vector<8x128xf32>
    %36 = arith.addf %20, %35 : vector<8x128xf32>
    %c0_18 = arith.constant 0 : index
    %c0_19 = arith.constant 0 : index
    %37 = vector.load %arg7[%c0_18, %c0_19] : memref<8x128xf32, #tpu.memory_space<vmem>>, vector<8x128xf32>
    tpu.vector_store %arg7[%c0_18, %c0_19], %36 {strides = array<i32>} : memref<8x128xf32, #tpu.memory_space<vmem>>, vector<8x128xf32>,
    return
  }
  func.func @transform_0(%arg0: i32) -> i32 {
    %c0_i32 = arith.constant 0 : i32
    %c0_i32_0 = arith.constant 0 : i32
    return %c0_i32 : i32
  }
  func.func @transform_1(%arg0: i32) -> (i32, i32) {
    %c0_i32 = arith.constant 0 : i32
    %c0_i32_0 = arith.constant 0 : i32
    return %arg0, %c0_i32 : i32, i32
  }
  func.func @transform_2(%arg0: i32) -> (i32, i32) {
    %c0_i32 = arith.constant 0 : i32
    %c0_i32_0 = arith.constant 0 : i32
    %c0_i32_1 = arith.constant 0 : i32
    return %c0_i32, %c0_i32_0 : i32, i32
  }
  func.func @transform_3(%arg0: i32) -> (i32, i32) {
    %c0_i32 = arith.constant 0 : i32
    %c0_i32_0 = arith.constant 0 : i32
    %c0_i32_1 = arith.constant 0 : i32
    return %c0_i32, %c0_i32_0 : i32, i32
  }
  func.func @transform_4(%arg0: i32) -> (i32, i32) {
    %c0_i32 = arith.constant 0 : i32
    %c0_i32_0 = arith.constant 0 : i32
    %c0_i32_1 = arith.constant 0 : i32
    return %c0_i32, %c0_i32_0 : i32, i32
  }
  func.func @transform_5(%arg0: i32) -> (i32, i32) {
    %c0_i32 = arith.constant 0 : i32
    %c0_i32_0 = arith.constant 0 : i32
    %c0_i32_1 = arith.constant 0 : i32
    return %c0_i32, %c0_i32_0 : i32, i32
  }
  func.func @transform_6(%arg0: i32) -> (i32, i32) {
    %c0_i32 = arith.constant 0 : i32
    %c0_i32_0 = arith.constant 0 : i32
    return %arg0, %c0_i32 : i32, i32
  }
}

module attributes {stable_mosaic.version = 11 : i64} {
  func.func @mixed_op_kernel(%arg0: i32, %arg1: memref<2xf32, #tpu.memory_space<smem>>, %arg2: memref<8x128xf32, #tpu.memory_space<vmem>>, %arg3: memref<128x256xbf16, #tpu.memory_space<vmem>>, %arg4: memref<1x256xf32, #tpu.memory_space<vmem>>, %arg5: memref<256x128xbf16, #tpu.memory_space<vmem>>, %arg6: memref<1x128xf32, #tpu.memory_space<vmem>>, %arg7: memref<8x128xf32, #tpu.memory_space<vmem>>) attributes {dimension_semantics = [#tpu.dimension_semantics<parallel>], iteration_bounds = array<i64: 2>, scalar_prefetch = 0 : i64, scratch_operands = 0 : i64, tpu.core_type = #tpu.core_type<tc>, window_params = [{transform_indices = @transform_0, window_bounds = array<i64: 2>}, {transform_indices = @transform_1, window_bounds = array<i64: 8, 128>}, {pipeline_mode = #tpu.pipeline_mode<synchronous>, transform_indices = @transform_2, window_bounds = array<i64: 128, 256>}, {pipeline_mode = #tpu.pipeline_mode<synchronous>, transform_indices = @transform_3, window_bounds = array<i64: 1, 256>}, {pipeline_mode = #tpu.pipeline_mode<synchronous>, transform_indices = @transform_4, window_bounds = array<i64: 256, 128>}, {pipeline_mode = #tpu.pipeline_mode<synchronous>, transform_indices = @transform_5, window_bounds = array<i64: 1, 128>}, {transform_indices = @transform_6, window_bounds = array<i64: 8, 128>}]} {
    %c0 = arith.constant 0 : index
    %c0_0 = arith.constant 0 : index
    %0 = vector.load %arg2[%c0, %c0_0] : memref<8x128xf32, #tpu.memory_space<vmem>>, vector<8x128xf32>
    %c0_1 = arith.constant 0 : index
    %c0_2 = arith.constant 0 : index
    %1 = vector.load %arg2[%c0_1, %c0_2] : memref<8x128xf32, #tpu.memory_space<vmem>>, vector<8x128xf32>
    %2 = arith.truncf %1 : vector<8x128xf32> to vector<8x128xbf16>
    %c0_3 = arith.constant 0 : index
    %c0_4 = arith.constant 0 : index
    %3 = vector.load %arg3[%c0_3, %c0_4] : memref<128x256xbf16, #tpu.memory_space<vmem>>, vector<128x256xbf16>
    %cst = arith.constant dense<0.000000e+00> : vector<8x256xf32>
    %4 = tpu.matmul %2, %3, %cst {dimension_numbers = #tpu.dot_dimension_numbers<[1], [0], [0], [1], [0, 0, 1, 1], [], []>} : vector<8x128xbf16>, vector<128x256xbf16>, vector<8x256xf32> -> vector<8x256xf32>
    %c0_5 = arith.constant 0 : index
    %c0_6 = arith.constant 0 : index
    %5 = vector.load %arg4[%c0_5, %c0_6] : memref<1x256xf32, #tpu.memory_space<vmem>>, vector<1x256xf32>
    %6 = vector.broadcast %5 : vector<1x256xf32> to vector<8x256xf32>
    %7 = arith.addf %4, %6 : vector<8x256xf32>
    %cst_7 = arith.constant 0.000000e+00 : f32
    %8 = vector.broadcast %cst_7 : f32 to vector<8x256xf32>
    %9 = arith.maximumf %7, %8 : vector<8x256xf32>
    %10 = arith.truncf %9 : vector<8x256xf32> to vector<8x256xbf16>
    %c0_8 = arith.constant 0 : index
    %c0_9 = arith.constant 0 : index
    %11 = vector.load %arg5[%c0_8, %c0_9] : memref<256x128xbf16, #tpu.memory_space<vmem>>, vector<256x128xbf16>
    %cst_10 = arith.constant dense<0.000000e+00> : vector<8x128xf32>
    %12 = tpu.matmul %10, %11, %cst_10 {dimension_numbers = #tpu.dot_dimension_numbers<[1], [0], [0], [1], [0, 0, 1, 1], [], []>} : vector<8x256xbf16>, vector<256x128xbf16>, vector<8x128xf32> -> vector<8x128xf32>
    %c0_11 = arith.constant 0 : index
    %c0_12 = arith.constant 0 : index
    %13 = vector.load %arg6[%c0_11, %c0_12] : memref<1x128xf32, #tpu.memory_space<vmem>>, vector<1x128xf32>
    %14 = vector.broadcast %13 : vector<1x128xf32> to vector<8x128xf32>
    %15 = arith.addf %12, %14 : vector<8x128xf32>
    %c0_13 = arith.constant 0 : index
    %16 = memref.load %arg1[%c0_13] : memref<2xf32, #tpu.memory_space<smem>>
    %c1 = arith.constant 1 : index
    %17 = memref.load %arg1[%c1] : memref<2xf32, #tpu.memory_space<smem>>
    %18 = vector.broadcast %16 : f32 to vector<8x128xf32>
    %19 = arith.mulf %18, %0 : vector<8x128xf32>
    %20 = arith.addf %19, %15 : vector<8x128xf32>
    %cst_14 = arith.constant 5.000000e-01 : f32
    %21 = vector.broadcast %cst_14 : f32 to vector<8x128xf32>
    %22 = arith.mulf %21, %0 : vector<8x128xf32>
    %cst_15 = arith.constant 4.471500e-02 : f32
    %23 = vector.broadcast %cst_15 : f32 to vector<8x128xf32>
    %24 = arith.mulf %23, %0 : vector<8x128xf32>
    %25 = arith.mulf %24, %0 : vector<8x128xf32>
    %26 = arith.mulf %25, %0 : vector<8x128xf32>
    %27 = arith.addf %0, %26 : vector<8x128xf32>
    %cst_16 = arith.constant 0.797884583 : f32
    %28 = vector.broadcast %cst_16 : f32 to vector<8x128xf32>
    %29 = arith.mulf %28, %27 : vector<8x128xf32>
    %30 = math.tanh %29 : vector<8x128xf32>
    %cst_17 = arith.constant 1.000000e+00 : f32
    %31 = vector.broadcast %cst_17 : f32 to vector<8x128xf32>
    %32 = arith.addf %31, %30 : vector<8x128xf32>
    %33 = arith.mulf %22, %32 : vector<8x128xf32>
    %34 = vector.broadcast %17 : f32 to vector<8x128xf32>
    %35 = arith.mulf %34, %33 : vector<8x128xf32>
    %36 = arith.addf %20, %35 : vector<8x128xf32>
    %c0_18 = arith.constant 0 : index
    %c0_19 = arith.constant 0 : index
    %37 = vector.load %arg7[%c0_18, %c0_19] : memref<8x128xf32, #tpu.memory_space<vmem>>, vector<8x128xf32>
    tpu.vector_store %arg7[%c0_18, %c0_19], %36 {strides = array<i32>} : memref<8x128xf32, #tpu.memory_space<vmem>>, vector<8x128xf32>,
    return
  }
  func.func @transform_0(%arg0: i32) -> i32 {
    %c0_i32 = arith.constant 0 : i32
    %c0_i32_0 = arith.constant 0 : i32
    return %c0_i32 : i32
  }
  func.func @transform_1(%arg0: i32) -> (i32, i32) {
    %c0_i32 = arith.constant 0 : i32
    %c0_i32_0 = arith.constant 0 : i32
    return %arg0, %c0_i32 : i32, i32
  }
  func.func @transform_2(%arg0: i32) -> (i32, i32) {
    %c0_i32 = arith.constant 0 : i32
    %c0_i32_0 = arith.constant 0 : i32
    %c0_i32_1 = arith.constant 0 : i32
    return %c0_i32, %c0_i32_0 : i32, i32
  }
  func.func @transform_3(%arg0: i32) -> (i32, i32) {
    %c0_i32 = arith.constant 0 : i32
    %c0_i32_0 = arith.constant 0 : i32
    %c0_i32_1 = arith.constant 0 : i32
    return %c0_i32, %c0_i32_0 : i32, i32
  }
  func.func @transform_4(%arg0: i32) -> (i32, i32) {
    %c0_i32 = arith.constant 0 : i32
    %c0_i32_0 = arith.constant 0 : i32
    %c0_i32_1 = arith.constant 0 : i32
    return %c0_i32, %c0_i32_0 : i32, i32
  }
  func.func @transform_5(%arg0: i32) -> (i32, i32) {
    %c0_i32 = arith.constant 0 : i32
    %c0_i32_0 = arith.constant 0 : i32
    %c0_i32_1 = arith.constant 0 : i32
    return %c0_i32, %c0_i32_0 : i32, i32
  }
  func.func @transform_6(%arg0: i32) -> (i32, i32) {
    %c0_i32 = arith.constant 0 : i32
    %c0_i32_0 = arith.constant 0 : i32
    return %arg0, %c0_i32 : i32, i32
  }
}

</mosaic_0001>

<llo_original>
// kernel: tpu_custom_call.1
$region0: #{tpu_custom_call.1}
  #allocation0 [shape = 'u32[]', space=smem, size = 0x4, offset = 0x4, fixed_abs, tag = 'smem constant byte address 0x4 - core index']
  #allocation1 [shape = 'u32[144,128]{1,0:T(1,128)}', space=vmem, size = 0x12000, scoped, tag = 'internal scratch']
  %s0 = inlined_call_operand.hbm [shape: f32[2], index: 0, kind: input, shape index: {}]
  %s1 = inlined_call_operand.hbm [shape: f32[16,128], index: 1, kind: input, shape index: {}]
  %s2 = inlined_call_operand.hbm [shape: bf16[128,256], index: 2, kind: input, shape index: {}]
  %s3 = inlined_call_operand.vmem [shape: f32[1,256], index: 3, kind: input, shape index: {}]
  %s4 = inlined_call_operand.hbm [shape: bf16[256,128], index: 4, kind: input, shape index: {}]
  %s5 = inlined_call_operand.vmem [shape: f32[1,128], index: 5, kind: input, shape index: {}]
  %s6 = inlined_call_operand.hbm [shape: f32[16,128], index: 6, kind: output, shape index: {}]
  %s7 = sld [smem:[#allocation0]]
  $region73: #{tpu_custom_call.1} parent=0
    _
  %s9 = ssub.s32 1, %s7
  %s10 = scalar_select 0, %s9, %s7
  $region1: #{tpu_custom_call.1} parent=0
    #allocation2 [shape = 'u8[512]{0}', space=smem, size = 0x200, scoped, tag = 'input window, operand 0, single buffered']
    #allocation3 [shape = 's32[2]{0}', space=sflag, size = 0x8, scoped, tag = 'scoped memory for tpu_custom_call.1']
    #allocation4 [shape = 's32[2]{0}', space=sflag, size = 0x8, scoped, tag = 'scoped memory for tpu_custom_call.1']
    #allocation5 [shape = 's32[2]{0}', space=sflag, size = 0x8, scoped, tag = 'scoped memory for tpu_custom_call.1']
    #allocation6 [shape = 'u8[8192]{0}', space=vmem, size = 0x2000, scoped, tag = 'input window, operand 1']
    #allocation7 [shape = 'u8[65536]{0}', space=vmem, size = 0x10000, scoped, tag = 'input window, operand 2, single buffered']
    #allocation8 [shape = 's32[1]{0}', space=sflag, size = 0x4, scoped, tag = 'scoped memory for tpu_custom_call.1']
    #allocation9 [shape = 'u8[65536]{0}', space=vmem, size = 0x10000, scoped, tag = 'input window, operand 4, single buffered']
    #allocation10 [shape = 'u8[8192]{0}', space=vmem, size = 0x2000, scoped, tag = 'output window, operand 0']
    %11 = vsyncpa [#allocation5], 0
    %12 = vsyncpa [#allocation3], 0
    %s13 = scalar_lea.sflag [#allocation3], 1
    %14 = vsyncpa %s13, 0
    %15 = vsyncpa [#allocation8], 0
    %16 = vsyncpa [#allocation4], 0
    %s17 = scalar_lea.sflag [#allocation4], 1
    %18 = vsyncpa %s17, 0
    loop: start=0, step=1, limit=4
    $region2: #{tpu_custom_call.1} parent=1 // loop_pre_header
      _
    $region3: #{tpu_custom_call.1} parent=1 // loop_header
      %s20 = sphi 0, %s24
      %p21 = scmp.ge.s32.totalorder %s20, 4
      %s28 = sphi 0, %s28
      %s30 = sphi 0, %s28
      %s31 = sphi 0, %s30
      %s45 = sphi 0, %s31
      %s51 = sphi 0, %s53
      %s54 = sphi 0, %s51
      %s55 = sphi 0, %s54
      %s71 = sphi 0, %s55
      %s75 = sphi 0, %s75
      %s77 = sphi 0, %s75
      %s78 = sphi 0, %s77
      %s92 = sphi 0, %s78
      %s96 = sphi 0, %s96
      %s98 = sphi 0, %s96
      %s99 = sphi 0, %s98
      %s113 = sphi 0, %s99
      %s117 = sphi 0, %s117
      %s119 = sphi 0, %s117
      %s120 = sphi 0, %s119
      %s134 = sphi 0, %s120
      %s138 = sphi 0, %s138
      %s140 = sphi 0, %s138
      %s141 = sphi 0, %s140
      %s155 = sphi 0, %s141
      %s161 = sphi 0, %s163
      %s164 = sphi 0, %s161
      %s165 = sphi 0, %s164
      %s181 = sphi 0, %s165
    $region4: #{tpu_custom_call.1} parent=1 // loop_header_branch
      %23 = sbr.rel (%p21) target = $region8
    $region5: #{tpu_custom_call.1} parent=1 // loop_body
      %s25 = ssub.s32 %s20, 1
      %s26 = ssub.s32 %s20, 2
      %s27 = sadd.s32 %s20, 1
      %s29 = sadd.s32 %s28, 1
      %p32 = scmp.eq.s32.totalorder %s20, 1
      %p33 = scmp.ne.s32.totalorder %s28, %s30
      %p34 = scmp.eq.s32.totalorder %s20, 0
      %p35 = por %p33, %p34
      %p36 = scmp.ne.s32.totalorder %s28, %s30
      %p37 = scmp.eq.s32.totalorder %s25, 1
      %p38 = por %p36, %p37
      %p39 = scmp.ne.s32.totalorder %s30, %s31
      %p40 = scmp.eq.s32.totalorder %s25, 0
      %p41 = por %p39, %p40
      %p42 = scmp.ne.s32.totalorder %s30, %s31
      %p43 = scmp.eq.s32.totalorder %s26, 1
      %p44 = por %p42, %p43
      %p46 = scmp.ne.s32.totalorder %s31, %s45
      %p47 = scmp.eq.s32.totalorder %s26, 0
      %p48 = por %p46, %p47
      %s49 = ssub.s32 %s20, %s27
      %p50 = scmp.eq.s32.totalorder %s49, 0
      %s52 = sadd.s32 %s51, 1
      %s53 = scalar_select %p50, %s51, %s52
      %p56 = pneg %p50
      %p57 = scmp.eq.s32.totalorder %s20, 1
      %p58 = por %p56, %p57
      %p59 = scmp.ne.s32.totalorder %s51, %s54
      %p60 = scmp.eq.s32.totalorder %s20, 0
      %p61 = por %p59, %p60
      %p62 = scmp.ne.s32.totalorder %s51, %s54
      %p63 = scmp.eq.s32.totalorder %s25, 1
      %p64 = por %p62, %p63
      %p65 = scmp.ne.s32.totalorder %s54, %s55
      %p66 = scmp.eq.s32.totalorder %s25, 0
      %p67 = por %p65, %p66
      %p68 = scmp.ne.s32.totalorder %s54, %s55
      %p69 = scmp.eq.s32.totalorder %s26, 1
      %p70 = por %p68, %p69
      %p72 = scmp.ne.s32.totalorder %s55, %s71
      %p73 = scmp.eq.s32.totalorder %s26, 0
      %p74 = por %p72, %p73
      %s76 = sadd.s32 %s75, 1
      %p79 = scmp.eq.s32.totalorder %s20, 1
      %p80 = scmp.ne.s32.totalorder %s75, %s77
      %p81 = scmp.eq.s32.totalorder %s20, 0
      %p82 = por %p80, %p81
      %p83 = scmp.ne.s32.totalorder %s75, %s77
      %p84 = scmp.eq.s32.totalorder %s25, 1
      %p85 = por %p83, %p84
      %p86 = scmp.ne.s32.totalorder %s77, %s78
      %p87 = scmp.eq.s32.totalorder %s25, 0
      %p88 = por %p86, %p87
      %p89 = scmp.ne.s32.totalorder %s77, %s78
      %p90 = scmp.eq.s32.totalorder %s26, 1
      %p91 = por %p89, %p90
      %p93 = scmp.ne.s32.totalorder %s78, %s92
      %p94 = scmp.eq.s32.totalorder %s26, 0
      %p95 = por %p93, %p94
      %s97 = sadd.s32 %s96, 1
      %p100 = scmp.eq.s32.totalorder %s20, 1
      %p101 = scmp.ne.s32.totalorder %s96, %s98
      %p102 = scmp.eq.s32.totalorder %s20, 0
      %p103 = por %p101, %p102
      %p104 = scmp.ne.s32.totalorder %s96, %s98
      %p105 = scmp.eq.s32.totalorder %s25, 1
      %p106 = por %p104, %p105
      %p107 = scmp.ne.s32.totalorder %s98, %s99
      %p108 = scmp.eq.s32.totalorder %s25, 0
      %p109 = por %p107, %p108
      %p110 = scmp.ne.s32.totalorder %s98, %s99
      %p111 = scmp.eq.s32.totalorder %s26, 1
      %p112 = por %p110, %p111
      %p114 = scmp.ne.s32.totalorder %s99, %s113
      %p115 = scmp.eq.s32.totalorder %s26, 0
      %p116 = por %p114, %p115
      %s118 = sadd.s32 %s117, 1
      %p121 = scmp.eq.s32.totalorder %s20, 1
      %p122 = scmp.ne.s32.totalorder %s117, %s119
      %p123 = scmp.eq.s32.totalorder %s20, 0
      %p124 = por %p122, %p123
      %p125 = scmp.ne.s32.totalorder %s117, %s119
      %p126 = scmp.eq.s32.totalorder %s25, 1
      %p127 = por %p125, %p126
      %p128 = scmp.ne.s32.totalorder %s119, %s120
      %p129 = scmp.eq.s32.totalorder %s25, 0
      %p130 = por %p128, %p129
      %p131 = scmp.ne.s32.totalorder %s119, %s120
      %p132 = scmp.eq.s32.totalorder %s26, 1
      %p133 = por %p131, %p132
      %p135 = scmp.ne.s32.totalorder %s120, %s134
      %p136 = scmp.eq.s32.totalorder %s26, 0
      %p137 = por %p135, %p136
      %s139 = sadd.s32 %s138, 1
      %p142 = scmp.eq.s32.totalorder %s20, 1
      %p143 = scmp.ne.s32.totalorder %s138, %s140
      %p144 = scmp.eq.s32.totalorder %s20, 0
      %p145 = por %p143, %p144
      %p146 = scmp.ne.s32.totalorder %s138, %s140
      %p147 = scmp.eq.s32.totalorder %s25, 1
      %p148 = por %p146, %p147
      %p149 = scmp.ne.s32.totalorder %s140, %s141
      %p150 = scmp.eq.s32.totalorder %s25, 0
      %p151 = por %p149, %p150
      %p152 = scmp.ne.s32.totalorder %s140, %s141
      %p153 = scmp.eq.s32.totalorder %s26, 1
      %p154 = por %p152, %p153
      %p156 = scmp.ne.s32.totalorder %s141, %s155
      %p157 = scmp.eq.s32.totalorder %s26, 0
      %p158 = por %p156, %p157
      %s159 = ssub.s32 %s20, %s27
      %p160 = scmp.eq.s32.totalorder %s159, 0
      %s162 = sadd.s32 %s161, 1
      %s163 = scalar_select %p160, %s161, %s162
      %p166 = pneg %p160
      %p167 = scmp.eq.s32.totalorder %s20, 1
      %p168 = por %p166, %p167
      %p169 = scmp.ne.s32.totalorder %s161, %s164
      %p170 = scmp.eq.s32.totalorder %s20, 0
      %p171 = por %p169, %p170
      %p172 = scmp.ne.s32.totalorder %s161, %s164
      %p173 = scmp.eq.s32.totalorder %s25, 1
      %p174 = por %p172, %p173
      %p175 = scmp.ne.s32.totalorder %s164, %s165
      %p176 = scmp.eq.s32.totalorder %s25, 0
      %p177 = por %p175, %p176
      %p178 = scmp.ne.s32.totalorder %s164, %s165
      %p179 = scmp.eq.s32.totalorder %s26, 1
      %p180 = por %p178, %p179
      %p182 = scmp.ne.s32.totalorder %s165, %s181
      %p183 = scmp.eq.s32.totalorder %s26, 0
      %p184 = por %p182, %p183
      %p185 = scmp.le.s32.totalorder 1, %s20
      %p186 = scmp.lt.s32.totalorder %s20, 3
      %p187 = pnand %p185, %p186
      %p188 = pneg %p187
      // Predicated region
      $region9: #{tpu_custom_call.1} parent=5 // pred_check
        _
      $region10: #{tpu_custom_call.1} parent=5 // pred_check_branch
        %190 = sbr.rel (%p187) target = $region12
      $region11: #{tpu_custom_call.1} parent=5 // pred_region
        %s191 = ssub.s32 %s20, 1
        // Predicated region
        $region13: #{tpu_custom_call.1} parent=11 // pred_check
          %p192 = pneg %p41
        $region14: #{tpu_custom_call.1} parent=11 // pred_check_branch
          %194 = sbr.rel (%p192) target = $region16
        $region15: #{tpu_custom_call.1} parent=11 // pred_region
          %s196 = ssub.s32 16, 16
          %197 = vsyncadd [#allocation5], %s196
          %200 = dma.hbm_to_smem %s0, 16, [#allocation2], [#allocation5]
        $region16: #{tpu_custom_call.1} parent=11 // pred_fallthru
          _
        // Predicated region
        $region17: #{tpu_custom_call.1} parent=11 // pred_check
          %p201 = pneg %p88
        $region18: #{tpu_custom_call.1} parent=11 // pred_check_branch
          %203 = sbr.rel (%p201) target = $region20
        $region19: #{tpu_custom_call.1} parent=11 // pred_region
          %s205 = ssub.s32 2048, 2048
          %206 = vsyncadd [#allocation8], %s205
          %s207 = sshll.u32 [#allocation7], 4
          %s208 = int_to_ptr.vmem [resolvable:$true] %s207
          %213 = dma.hbm_to_vmem [thread:$0]  %s2, 2048, %s208, [#allocation8], 128, 128, 8
        $region20: #{tpu_custom_call.1} parent=11 // pred_fallthru
          _
        // Predicated region
        $region21: #{tpu_custom_call.1} parent=11 // pred_check
          %p214 = pneg %p109
        $region22: #{tpu_custom_call.1} parent=11 // pred_check_branch
          %216 = sbr.rel (%p214) target = $region24
        $region23: #{tpu_custom_call.1} parent=11 // pred_region
          _
        $region24: #{tpu_custom_call.1} parent=11 // pred_fallthru
          _
        // Predicated region
        $region25: #{tpu_custom_call.1} parent=11 // pred_check
          %p217 = pneg %p130
        $region26: #{tpu_custom_call.1} parent=11 // pred_check_branch
          %219 = sbr.rel (%p217) target = $region28
        $region27: #{tpu_custom_call.1} parent=11 // pred_region
          %s221 = ssub.s32 2048, 2048
          %222 = vsyncadd [#allocation8], %s221
          %s223 = sshll.u32 [#allocation9], 4
          %s224 = int_to_ptr.vmem [resolvable:$true] %s223
          %229 = dma.hbm_to_vmem [thread:$0]  %s4, 2048, %s224, [#allocation8], 64, 64, 4
        $region28: #{tpu_custom_call.1} parent=11 // pred_fallthru
          _
        // Predicated region
        $region29: #{tpu_custom_call.1} parent=11 // pred_check
          %p230 = pneg %p151
        $region30: #{tpu_custom_call.1} parent=11 // pred_check_branch
          %232 = sbr.rel (%p230) target = $region32
        $region31: #{tpu_custom_call.1} parent=11 // pred_region
          _
        $region32: #{tpu_custom_call.1} parent=11 // pred_fallthru
          _
      $region12: #{tpu_custom_call.1} parent=5 // pred_fallthru
        _
      %p233 = scmp.lt.s32.totalorder %s20, 2
      // Predicated region
      $region33: #{tpu_custom_call.1} parent=5 // pred_check
        %p234 = pneg %p233
      $region34: #{tpu_custom_call.1} parent=5 // pred_check_branch
        %236 = sbr.rel (%p234) target = $region36
      $region35: #{tpu_custom_call.1} parent=5 // pred_region
        // Predicated region
        $region37: #{tpu_custom_call.1} parent=35 // pred_check
          %p237 = pneg %p61
        $region38: #{tpu_custom_call.1} parent=35 // pred_check_branch
          %239 = sbr.rel (%p237) target = $region40
        $region39: #{tpu_custom_call.1} parent=35 // pred_region
          %s240 = sand.u32 %s51, 1
          %s241 = scalar_lea.sflag [#allocation3], %s240
          %s242 = sand.u32 %s51, 1
          %s243 = smul.addr %s242, 8
          %s244 = scalar_lea.vmem [#allocation6], %s243
          %s246 = ssub.s32 128, 128
          %247 = vsyncadd %s241, %s246
          %s248 = smul.addr %s20, 128
          %s249 = scalar_lea.hbm %s1, %s248
          %s251 = sshll.u32 %s244, 4
          %s252 = int_to_ptr.vmem [resolvable:$true] %s251
          %254 = dma.hbm_to_vmem [thread:$0]  %s249, 128, %s252, %s241
        $region40: #{tpu_custom_call.1} parent=35 // pred_fallthru
          _
      $region36: #{tpu_custom_call.1} parent=5 // pred_fallthru
        _
      %p255 = scmp.le.s32.totalorder 1, %s20
      %p256 = scmp.lt.s32.totalorder %s20, 3
      %p257 = pnand %p255, %p256
      %p258 = pneg %p257
      // Predicated region
      $region41: #{tpu_custom_call.1} parent=5 // pred_check
        _
      $region42: #{tpu_custom_call.1} parent=5 // pred_check_branch
        %260 = sbr.rel (%p257) target = $region44
      $region43: #{tpu_custom_call.1} parent=5 // pred_region
        %s261 = ssub.s32 %s20, 1
        // Predicated region
        $region45: #{tpu_custom_call.1} parent=43 // pred_check
          %p262 = pneg %p41
        $region46: #{tpu_custom_call.1} parent=43 // pred_check_branch
          %264 = sbr.rel (%p262) target = $region48
        $region47: #{tpu_custom_call.1} parent=43 // pred_region
          %265 = dma.done [#allocation5], 16
        $region48: #{tpu_custom_call.1} parent=43 // pred_fallthru
          _
        %s266 = sand.u32 %s54, 1
        %s267 = scalar_lea.sflag [#allocation3], %s266
        %s268 = sand.u32 %s54, 1
        %s269 = smul.addr %s268, 8
        %s270 = scalar_lea.vmem [#allocation6], %s269
        // Predicated region
        $region49: #{tpu_custom_call.1} parent=43 // pred_check
          %p271 = pneg %p67
        $region50: #{tpu_custom_call.1} parent=43 // pred_check_branch
          %273 = sbr.rel (%p271) target = $region52
        $region51: #{tpu_custom_call.1} parent=43 // pred_region
          %274 = dma.done %s267, 128
        $region52: #{tpu_custom_call.1} parent=43 // pred_fallthru
          _
        // Predicated region
        $region53: #{tpu_custom_call.1} parent=43 // pred_check
          %p275 = pneg %p88
        $region54: #{tpu_custom_call.1} parent=43 // pred_check_branch
          %277 = sbr.rel (%p275) target = $region56
        $region55: #{tpu_custom_call.1} parent=43 // pred_region
          %278 = dma.done [#allocation8], 2048
        $region56: #{tpu_custom_call.1} parent=43 // pred_fallthru
          _
        // Predicated region
        $region57: #{tpu_custom_call.1} parent=43 // pred_check
          %p279 = pneg %p130
        $region58: #{tpu_custom_call.1} parent=43 // pred_check_branch
          %281 = sbr.rel (%p279) target = $region60
        $region59: #{tpu_custom_call.1} parent=43 // pred_region
          %282 = dma.done [#allocation8], 2048
        $region60: #{tpu_custom_call.1} parent=43 // pred_fallthru
          _
        %283 = sfence
        %p284 = pneg %p41
        %p285 = pneg %p38
        %s286 = sand.u32 %s54, 1
        %s287 = scalar_lea.sflag [#allocation3], %s286
        %s288 = sand.u32 %s54, 1
        %s289 = smul.addr %s288, 8
        %s290 = scalar_lea.vmem [#allocation6], %s289
        %p291 = pneg %p67
        %p292 = pneg %p64
        %p293 = pneg %p88
        %p294 = pneg %p85
        %p295 = pneg %p109
        %p296 = pneg %p106
        %p297 = pneg %p130
        %p298 = pneg %p127
        %p299 = pneg %p151
        %p300 = pneg %p148
        %p301 = pneg %p177
        %p302 = pneg %p174
        %s303 = sand.u32 %s164, 1
        %s304 = scalar_lea.sflag [#allocation4], %s303
        %s305 = sand.u32 %s164, 1
        %s306 = smul.addr %s305, 8
        %s307 = scalar_lea.vmem [#allocation10], %s306
        %v309 = vld [vmem:[%s270] sm:$0xff]
        %v310 = vpack.c.bf16 %v309, %v309
        %v311 = vld [vmem:[#allocation7] sm:$0xff]
        %v312 = vld [vmem:[#allocation7 + $0x8] sm:$0xff]
        %v313 = vld [vmem:[#allocation7 + $0x10] sm:$0xff]
        %v314 = vld [vmem:[#allocation7 + $0x18] sm:$0xff]
        %v315 = vld [vmem:[#allocation7 + $0x20] sm:$0xff]
        %v316 = vld [vmem:[#allocation7 + $0x28] sm:$0xff]
        %v317 = vld [vmem:[#allocation7 + $0x30] sm:$0xff]
        %v318 = vld [vmem:[#allocation7 + $0x38] sm:$0xff]
        %v319 = vld [vmem:[#allocation7 + $0x40] sm:$0xff]
        %v320 = vld [vmem:[#allocation7 + $0x48] sm:$0xff]
        %v321 = vld [vmem:[#allocation7 + $0x50] sm:$0xff]
        %v322 = vld [vmem:[#allocation7 + $0x58] sm:$0xff]
        %v323 = vld [vmem:[#allocation7 + $0x60] sm:$0xff]
        %v324 = vld [vmem:[#allocation7 + $0x68] sm:$0xff]
        %v325 = vld [vmem:[#allocation7 + $0x70] sm:$0xff]
        %v326 = vld [vmem:[#allocation7 + $0x78] sm:$0xff]
        %v327 = vld [vmem:[%s3] sm:$0x3]
        %v329 = vlaneseq
        %v330 = vshrl.u32 %v329, 7
        %v331 = vsub.s32 0, %v330
        %v332 = vrot.slane %v327, %v331
        %v333 = vlaneseq
        %v334 = vshrl.u32 %v333, 7
        %v335 = vsub.s32 1, %v334
        %v336 = vrot.slane %v327, %v335
        %v355 = vunpack.c.l.b16 %v311
        %v356 = vunpack.c.h.b16 %v311
        %v357 = vunpack.c.l.b16 %v312
        %v358 = vunpack.c.h.b16 %v312
        %v359 = vunpack.c.l.b16 %v313
        %v360 = vunpack.c.h.b16 %v313
        %v361 = vunpack.c.l.b16 %v314
        %v362 = vunpack.c.h.b16 %v314
        %v363 = vunpack.c.l.b16 %v315
        %v364 = vunpack.c.h.b16 %v315
        %v365 = vunpack.c.l.b16 %v316
        %v366 = vunpack.c.h.b16 %v316
        %v367 = vunpack.c.l.b16 %v317
        %v368 = vunpack.c.h.b16 %v317
        %v369 = vunpack.c.l.b16 %v318
        %v370 = vunpack.c.h.b16 %v318
        %v371 = vunpack.c.l.b16 %v319
        %v372 = vunpack.c.h.b16 %v319
        %v373 = vunpack.c.l.b16 %v320
        %v374 = vunpack.c.h.b16 %v320
        %v375 = vunpack.c.l.b16 %v321
        %v376 = vunpack.c.h.b16 %v321
        %v377 = vunpack.c.l.b16 %v322
        %v378 = vunpack.c.h.b16 %v322
        %v379 = vunpack.c.l.b16 %v323
        %v380 = vunpack.c.h.b16 %v323
        %v381 = vunpack.c.l.b16 %v324
        %v382 = vunpack.c.h.b16 %v324
        %v383 = vunpack.c.l.b16 %v325
        %v384 = vunpack.c.h.b16 %v325
        %v385 = vunpack.c.l.b16 %v326
        %v386 = vunpack.c.h.b16 %v326
        %v387 = vpack.c.b16 %v357, %v355
        %v388 = vpack.c.b16 %v358, %v356
        %v389 = vpack.c.b16 %v361, %v359
        %v390 = vpack.c.b16 %v362, %v360
        %v391 = vpack.c.b16 %v365, %v363
        %v392 = vpack.c.b16 %v366, %v364
        %v393 = vpack.c.b16 %v369, %v367
        %v394 = vpack.c.b16 %v370, %v368
        %v395 = vpack.c.b16 %v373, %v371
        %v396 = vpack.c.b16 %v374, %v372
        %v397 = vpack.c.b16 %v377, %v375
        %v398 = vpack.c.b16 %v378, %v376
        %v399 = vpack.c.b16 %v381, %v379
        %v400 = vpack.c.b16 %v382, %v380
        %v401 = vpack.c.b16 %v385, %v383
        %v402 = vpack.c.b16 %v386, %v384
        %419 = vmatprep.subr.bf16.mxu0 %v402
        %420 = vmatpush1.bf16.msra.mxu0 %v401
        %421 = vmatprep.subr.bf16.mxu0 %v400
        %422 = vmatpush1.bf16.msra.mxu0 %v399
        %423 = vmatprep.subr.bf16.mxu0 %v398
        %424 = vmatpush1.bf16.msra.mxu0 %v397
        %425 = vmatprep.subr.bf16.mxu0 %v396
        %426 = vmatpush1.bf16.msra.mxu0 %v395
        %427 = vmatprep.subr.bf16.mxu0 %v394
        %428 = vmatpush1.bf16.msra.mxu0 %v393
        %429 = vmatprep.subr.bf16.mxu0 %v392
        %430 = vmatpush1.bf16.msra.mxu0 %v391
        %431 = vmatprep.subr.bf16.mxu0 %v390
        %432 = vmatpush1.bf16.msra.mxu0 %v389
        %433 = vmatprep.subr.bf16.mxu0 %v388
        %434 = vmatpush1.bf16.msra.mxu0 %v387
        %435 = vmatprep.subr.bf16.mxu0 0
        %436 = vmatpush2.bf16.msra.mxu0 0
        %437 = vmatprep.subr.bf16.mxu0 0
        %438 = vmatpush2.bf16.msra.mxu0 0
        %439 = vmatprep.subr.bf16.mxu0 0
        %440 = vmatpush2.bf16.msra.mxu0 0
        %441 = vmatprep.subr.bf16.mxu0 0
        %442 = vmatpush2.bf16.msra.mxu0 0
        %443 = vmatprep.subr.bf16.mxu0 0
        %444 = vmatpush2.bf16.msra.mxu0 0
        %445 = vmatprep.subr.bf16.mxu0 0
        %446 = vmatpush2.bf16.msra.mxu0 0
        %447 = vmatprep.subr.bf16.mxu0 0
        %448 = vmatpush2.bf16.msra.mxu0 0
        %449 = vmatprep.subr.bf16.mxu0 0
        %450 = vmatpush2.bf16.msra.mxu0 0
        %451 = vmatprep.mubr.bf16.mxu0 0
        %452 = vmatmul.mubr.bf16.gmra.mxu0 %v310
        %v453 = vpop.f32.mrf.mxu0
        %v454 = vadd.f32 %v332, %v453
        %v455 = vpop.f32.mrf.mxu0
        %v456 = vadd.f32 %v336, %v455
        %v457 = vpop.f32.mrf.mxu0
        %v458 = vpop.f32.mrf.mxu0
        %459 = vdwg.mxu0
        %v460 = vmax.f32 %v454, 0.0
        %v461 = vmax.f32 %v456, 0.0
        %v462 = vpack.c.bf16 %v460, %v460
        %v463 = vpack.c.bf16 %v461, %v461
        %v464 = vld [vmem:[#allocation9] sm:$0xf]
        %v465 = vld [vmem:[#allocation9 + $0x4] sm:$0xf]
        %v466 = vld [vmem:[#allocation9 + $0x8] sm:$0xf]
        %v467 = vld [vmem:[#allocation9 + $0xc] sm:$0xf]
        %v468 = vld [vmem:[#allocation9 + $0x10] sm:$0xf]
        %v469 = vld [vmem:[#allocation9 + $0x14] sm:$0xf]
        %v470 = vld [vmem:[#allocation9 + $0x18] sm:$0xf]
        %v471 = vld [vmem:[#allocation9 + $0x1c] sm:$0xf]
        %v472 = vld [vmem:[#allocation9 + $0x20] sm:$0xf]
        %v473 = vld [vmem:[#allocation9 + $0x24] sm:$0xf]
        %v474 = vld [vmem:[#allocation9 + $0x28] sm:$0xf]
        %v475 = vld [vmem:[#allocation9 + $0x2c] sm:$0xf]
        %v476 = vld [vmem:[#allocation9 + $0x30] sm:$0xf]
        %v477 = vld [vmem:[#allocation9 + $0x34] sm:$0xf]
        %v478 = vld [vmem:[#allocation9 + $0x38] sm:$0xf]
        %v479 = vld [vmem:[#allocation9 + $0x3c] sm:$0xf]
        %v480 = vld [vmem:[#allocation9 + $0x40] sm:$0xf]
        %v481 = vld [vmem:[#allocation9 + $0x44] sm:$0xf]
        %v482 = vld [vmem:[#allocation9 + $0x48] sm:$0xf]
        %v483 = vld [vmem:[#allocation9 + $0x4c] sm:$0xf]
        %v484 = vld [vmem:[#allocation9 + $0x50] sm:$0xf]
        %v485 = vld [vmem:[#allocation9 + $0x54] sm:$0xf]
        %v486 = vld [vmem:[#allocation9 + $0x58] sm:$0xf]
        %v487 = vld [vmem:[#allocation9 + $0x5c] sm:$0xf]
        %v488 = vld [vmem:[#allocation9 + $0x60] sm:$0xf]
        %v489 = vld [vmem:[#allocation9 + $0x64] sm:$0xf]
        %v490 = vld [vmem:[#allocation9 + $0x68] sm:$0xf]
        %v491 = vld [vmem:[#allocation9 + $0x6c] sm:$0xf]
        %v492 = vld [vmem:[#allocation9 + $0x70] sm:$0xf]
        %v493 = vld [vmem:[#allocation9 + $0x74] sm:$0xf]
        %v494 = vld [vmem:[#allocation9 + $0x78] sm:$0xf]
        %v495 = vld [vmem:[#allocation9 + $0x7c] sm:$0xf]
        %v496 = vld [vmem:[%s5] sm:$0x1]
        %v498 = vlaneseq
        %v499 = vshrl.u32 %v498, 7
        %v500 = vsub.s32 0, %v499
        %v501 = vrot.slane %v496, %v500
        %v535 = vunpack.c.l.b16 %v464
        %v536 = vunpack.c.l.b16 %v465
        %v537 = vunpack.c.l.b16 %v466
        %v538 = vunpack.c.l.b16 %v467
        %v539 = vunpack.c.l.b16 %v468
        %v540 = vunpack.c.l.b16 %v469
        %v541 = vunpack.c.l.b16 %v470
        %v542 = vunpack.c.l.b16 %v471
        %v543 = vunpack.c.l.b16 %v472
        %v544 = vunpack.c.l.b16 %v473
        %v545 = vunpack.c.l.b16 %v474
        %v546 = vunpack.c.l.b16 %v475
        %v547 = vunpack.c.l.b16 %v476
        %v548 = vunpack.c.l.b16 %v477
        %v549 = vunpack.c.l.b16 %v478
        %v550 = vunpack.c.l.b16 %v479
        %v551 = vunpack.c.l.b16 %v480
        %v552 = vunpack.c.l.b16 %v481
        %v553 = vunpack.c.l.b16 %v482
        %v554 = vunpack.c.l.b16 %v483
        %v555 = vunpack.c.l.b16 %v484
        %v556 = vunpack.c.l.b16 %v485
        %v557 = vunpack.c.l.b16 %v486
        %v558 = vunpack.c.l.b16 %v487
        %v559 = vunpack.c.l.b16 %v488
        %v560 = vunpack.c.l.b16 %v489
        %v561 = vunpack.c.l.b16 %v490
        %v562 = vunpack.c.l.b16 %v491
        %v563 = vunpack.c.l.b16 %v492
        %v564 = vunpack.c.l.b16 %v493
        %v565 = vunpack.c.l.b16 %v494
        %v566 = vunpack.c.l.b16 %v495
        %v567 = vpack.c.b16 %v536, %v535
        %v568 = vpack.c.b16 %v538, %v537
        %v569 = vpack.c.b16 %v540, %v539
        %v570 = vpack.c.b16 %v542, %v541
        %v571 = vpack.c.b16 %v544, %v543
        %v572 = vpack.c.b16 %v546, %v545
        %v573 = vpack.c.b16 %v548, %v547
        %v574 = vpack.c.b16 %v550, %v549
        %v575 = vpack.c.b16 %v552, %v551
        %v576 = vpack.c.b16 %v554, %v553
        %v577 = vpack.c.b16 %v556, %v555
        %v578 = vpack.c.b16 %v558, %v557
        %v579 = vpack.c.b16 %v560, %v559
        %v580 = vpack.c.b16 %v562, %v561
        %v581 = vpack.c.b16 %v564, %v563
        %v582 = vpack.c.b16 %v566, %v565
        %599 = vmatprep.subr.bf16.mxu0 0
        %600 = vmatpush1.bf16.msra.mxu0 %v574
        %601 = vmatprep.subr.bf16.mxu0 0
        %602 = vmatpush1.bf16.msra.mxu0 %v573
        %603 = vmatprep.subr.bf16.mxu0 0
        %604 = vmatpush1.bf16.msra.mxu0 %v572
        %605 = vmatprep.subr.bf16.mxu0 0
        %606 = vmatpush1.bf16.msra.mxu0 %v571
        %607 = vmatprep.subr.bf16.mxu0 0
        %608 = vmatpush1.bf16.msra.mxu0 %v570
        %609 = vmatprep.subr.bf16.mxu0 0
        %610 = vmatpush1.bf16.msra.mxu0 %v569
        %611 = vmatprep.subr.bf16.mxu0 0
        %612 = vmatpush1.bf16.msra.mxu0 %v568
        %613 = vmatprep.subr.bf16.mxu0 0
        %614 = vmatpush1.bf16.msra.mxu0 %v567
        %615 = vmatprep.subr.bf16.mxu0 0
        %616 = vmatpush2.bf16.msra.mxu0 %v582
        %617 = vmatprep.subr.bf16.mxu0 0
        %618 = vmatpush2.bf16.msra.mxu0 %v581
        %619 = vmatprep.subr.bf16.mxu0 0
        %620 = vmatpush2.bf16.msra.mxu0 %v580
        %621 = vmatprep.subr.bf16.mxu0 0
        %622 = vmatpush2.bf16.msra.mxu0 %v579
        %623 = vmatprep.subr.bf16.mxu0 0
        %624 = vmatpush2.bf16.msra.mxu0 %v578
        %625 = vmatprep.subr.bf16.mxu0 0
        %626 = vmatpush2.bf16.msra.mxu0 %v577
        %627 = vmatprep.subr.bf16.mxu0 0
        %628 = vmatpush2.bf16.msra.mxu0 %v576
        %629 = vmatprep.subr.bf16.mxu0 0
        %630 = vmatpush2.bf16.msra.mxu0 %v575
        %631 = vmatprep.mubr.bf16.mxu0 %v463
        %632 = vmatmul.mubr.bf16.gmra.mxu0 %v462
        %v633 = vpop.f32.mrf.mxu0
        %v634 = vadd.f32 %v501, %v633
        %v635 = vpop.f32.mrf.mxu0
        %v636 = vpop.f32.mrf.mxu0
        %v637 = vpop.f32.mrf.mxu0
        %638 = vdwg.mxu0
        %s639 = sld [smem:[#allocation2]]
        %s640 = sld [smem:[#allocation2 + $0x1]]
        %v641 = vstv %s639
        %v642 = vmul.f32 %v641, %v309
        %v643 = vadd.f32 %v642, %v634
        %v644 = vmul.f32 %v309, 0.5
        %v645 = vmul.f32 %v309, 0.044715
        %v646 = vmul.f32 %v645, %v309
        %v647 = vmul.f32 %v646, %v309
        %v648 = vadd.f32 %v309, %v647
        %v649 = vmul.f32 %v648, 0.7978846
        %v650 = vtanh.pop %v649
        %v651 = vadd.f32 %v650, 1.0
        %v652 = vmul.f32 %v644, %v651
        %v653 = vstv %s640
        %v654 = vmul.f32 %v653, %v652
        %v655 = vadd.f32 %v643, %v654
        %656 = vst [vmem:[%s307] sm:$0xff] %v655
        %s657 = sand.u32 %s164, 1
        %s658 = scalar_lea.sflag [#allocation4], %s657
        %s659 = sand.u32 %s164, 1
        %s660 = smul.addr %s659, 8
        %s661 = scalar_lea.vmem [#allocation10], %s660
        // Predicated region
        $region61: #{tpu_custom_call.1} parent=43 // pred_check
          %p662 = pneg %p174
        $region62: #{tpu_custom_call.1} parent=43 // pred_check_branch
          %664 = sbr.rel (%p662) target = $region64
        $region63: #{tpu_custom_call.1} parent=43 // pred_region
          %s666 = ssub.s32 128, 128
          %667 = vsyncadd %s658, %s666
          %s668 = smul.addr %s25, 128
          %s669 = scalar_lea.hbm %s6, %s668
          %s671 = sshll.u32 %s661, 4
          %s672 = int_to_ptr.vmem [resolvable:$true] %s671
          %674 = dma.vmem_to_hbm [thread:$0]  %s672, 128, %s669, %s658
        $region64: #{tpu_custom_call.1} parent=43 // pred_fallthru
          _
      $region44: #{tpu_custom_call.1} parent=5 // pred_fallthru
        _
      %p675 = scmp.le.s32.totalorder 2, %s20
      // Predicated region
      $region65: #{tpu_custom_call.1} parent=5 // pred_check
        %p676 = pneg %p675
      $region66: #{tpu_custom_call.1} parent=5 // pred_check_branch
        %678 = sbr.rel (%p676) target = $region68
      $region67: #{tpu_custom_call.1} parent=5 // pred_region
        %s679 = ssub.s32 %s20, 2
        // Predicated region
        $region69: #{tpu_custom_call.1} parent=67 // pred_check
          %p680 = pneg %p180
        $region70: #{tpu_custom_call.1} parent=67 // pred_check_branch
          %682 = sbr.rel (%p680) target = $region72
        $region71: #{tpu_custom_call.1} parent=67 // pred_region
          %s683 = sand.u32 %s165, 1
          %s684 = scalar_lea.sflag [#allocation4], %s683
          %s685 = sand.u32 %s165, 1
          %s686 = smul.addr %s685, 8
          %s687 = scalar_lea.vmem [#allocation10], %s686
          %688 = dma.done %s684, 128
        $region72: #{tpu_custom_call.1} parent=67 // pred_fallthru
          _
      $region68: #{tpu_custom_call.1} parent=5 // pred_fallthru
        _
    $region6: #{tpu_custom_call.1} parent=1 // loop_footer
      %s24 = sadd.s32 1, %s20
    $region7: #{tpu_custom_call.1} parent=1 // loop_footer_branch
      %19 = sbr.rel target = $region3
    $region8: #{tpu_custom_call.1} parent=1 // loop_exit
      _
    %689 = vsyncpa [#allocation3], 1
    %s690 = scalar_lea.sflag [#allocation3], 1
    %691 = vsyncpa %s690, 1
    %692 = vsyncpa [#allocation8], 1
    %693 = vsyncpa [#allocation4], 1
    %s694 = scalar_lea.sflag [#allocation4], 1
    %695 = vsyncpa %s694, 1
    %696 = vsyncpa [#allocation5], 1
    %s697 = scalar_lea.sflag [#allocation5], 1
    %698 = vsyncpa %s697, 1

// kernel: tpu_custom_call.1
$region0: #{tpu_custom_call.1}
  #allocation0 [shape = 'u32[]', space=smem, size = 0x4, offset = 0x4, fixed_abs, tag = 'smem constant byte address 0x4 - core index']
  #allocation1 [shape = 'u32[144,128]{1,0:T(1,128)}', space=vmem, size = 0x12000, scoped, tag = 'internal scratch']
  %s0 = inlined_call_operand.hbm [shape: f32[2], index: 0, kind: input, shape index: {}]
  %s1 = inlined_call_operand.hbm [shape: f32[16,128], index: 1, kind: input, shape index: {}]
  %s2 = inlined_call_operand.hbm [shape: bf16[128,256], index: 2, kind: input, shape index: {}]
  %s3 = inlined_call_operand.vmem [shape: f32[1,256], index: 3, kind: input, shape index: {}]
  %s4 = inlined_call_operand.hbm [shape: bf16[256,128], index: 4, kind: input, shape index: {}]
  %s5 = inlined_call_operand.vmem [shape: f32[1,128], index: 5, kind: input, shape index: {}]
  %s6 = inlined_call_operand.hbm [shape: f32[16,128], index: 6, kind: output, shape index: {}]
  %s7 = sld [smem:[#allocation0]]
  $region73: #{tpu_custom_call.1} parent=0
    _
  %s9 = ssub.s32 1, %s7
  %s10 = scalar_select 0, %s9, %s7
  $region1: #{tpu_custom_call.1} parent=0
    #allocation2 [shape = 'u8[512]{0}', space=smem, size = 0x200, scoped, tag = 'input window, operand 0, single buffered']
    #allocation3 [shape = 's32[2]{0}', space=sflag, size = 0x8, scoped, tag = 'scoped memory for tpu_custom_call.1']
    #allocation4 [shape = 's32[2]{0}', space=sflag, size = 0x8, scoped, tag = 'scoped memory for tpu_custom_call.1']
    #allocation5 [shape = 's32[2]{0}', space=sflag, size = 0x8, scoped, tag = 'scoped memory for tpu_custom_call.1']
    #allocation6 [shape = 'u8[8192]{0}', space=vmem, size = 0x2000, scoped, tag = 'input window, operand 1']
    #allocation7 [shape = 'u8[65536]{0}', space=vmem, size = 0x10000, scoped, tag = 'input window, operand 2, single buffered']
    #allocation8 [shape = 's32[1]{0}', space=sflag, size = 0x4, scoped, tag = 'scoped memory for tpu_custom_call.1']
    #allocation9 [shape = 'u8[65536]{0}', space=vmem, size = 0x10000, scoped, tag = 'input window, operand 4, single buffered']
    #allocation10 [shape = 'u8[8192]{0}', space=vmem, size = 0x2000, scoped, tag = 'output window, operand 0']
    %11 = vsyncpa [#allocation5], 0
    %12 = vsyncpa [#allocation3], 0
    %s13 = scalar_lea.sflag [#allocation3], 1
    %14 = vsyncpa %s13, 0
    %15 = vsyncpa [#allocation8], 0
    %16 = vsyncpa [#allocation4], 0
    %s17 = scalar_lea.sflag [#allocation4], 1
    %18 = vsyncpa %s17, 0
    loop: start=0, step=1, limit=4
    $region2: #{tpu_custom_call.1} parent=1 // loop_pre_header
      _
    $region3: #{tpu_custom_call.1} parent=1 // loop_header
      %s20 = sphi 0, %s24
      %p21 = scmp.ge.s32.totalorder %s20, 4
      %s28 = sphi 0, %s28
      %s30 = sphi 0, %s28
      %s31 = sphi 0, %s30
      %s45 = sphi 0, %s31
      %s51 = sphi 0, %s53
      %s54 = sphi 0, %s51
      %s55 = sphi 0, %s54
      %s71 = sphi 0, %s55
      %s75 = sphi 0, %s75
      %s77 = sphi 0, %s75
      %s78 = sphi 0, %s77
      %s92 = sphi 0, %s78
      %s96 = sphi 0, %s96
      %s98 = sphi 0, %s96
      %s99 = sphi 0, %s98
      %s113 = sphi 0, %s99
      %s117 = sphi 0, %s117
      %s119 = sphi 0, %s117
      %s120 = sphi 0, %s119
      %s134 = sphi 0, %s120
      %s138 = sphi 0, %s138
      %s140 = sphi 0, %s138
      %s141 = sphi 0, %s140
      %s155 = sphi 0, %s141
      %s161 = sphi 0, %s163
      %s164 = sphi 0, %s161
      %s165 = sphi 0, %s164
      %s181 = sphi 0, %s165
    $region4: #{tpu_custom_call.1} parent=1 // loop_header_branch
      %23 = sbr.rel (%p21) target = $region8
    $region5: #{tpu_custom_call.1} parent=1 // loop_body
      %s25 = ssub.s32 %s20, 1
      %s26 = ssub.s32 %s20, 2
      %s27 = sadd.s32 %s20, 1
      %s29 = sadd.s32 %s28, 1
      %p32 = scmp.eq.s32.totalorder %s20, 1
      %p33 = scmp.ne.s32.totalorder %s28, %s30
      %p34 = scmp.eq.s32.totalorder %s20, 0
      %p35 = por %p33, %p34
      %p36 = scmp.ne.s32.totalorder %s28, %s30
      %p37 = scmp.eq.s32.totalorder %s25, 1
      %p38 = por %p36, %p37
      %p39 = scmp.ne.s32.totalorder %s30, %s31
      %p40 = scmp.eq.s32.totalorder %s25, 0
      %p41 = por %p39, %p40
      %p42 = scmp.ne.s32.totalorder %s30, %s31
      %p43 = scmp.eq.s32.totalorder %s26, 1
      %p44 = por %p42, %p43
      %p46 = scmp.ne.s32.totalorder %s31, %s45
      %p47 = scmp.eq.s32.totalorder %s26, 0
      %p48 = por %p46, %p47
      %s49 = ssub.s32 %s20, %s27
      %p50 = scmp.eq.s32.totalorder %s49, 0
      %s52 = sadd.s32 %s51, 1
      %s53 = scalar_select %p50, %s51, %s52
      %p56 = pneg %p50
      %p57 = scmp.eq.s32.totalorder %s20, 1
      %p58 = por %p56, %p57
      %p59 = scmp.ne.s32.totalorder %s51, %s54
      %p60 = scmp.eq.s32.totalorder %s20, 0
      %p61 = por %p59, %p60
      %p62 = scmp.ne.s32.totalorder %s51, %s54
      %p63 = scmp.eq.s32.totalorder %s25, 1
      %p64 = por %p62, %p63
      %p65 = scmp.ne.s32.totalorder %s54, %s55
      %p66 = scmp.eq.s32.totalorder %s25, 0
      %p67 = por %p65, %p66
      %p68 = scmp.ne.s32.totalorder %s54, %s55
      %p69 = scmp.eq.s32.totalorder %s26, 1
      %p70 = por %p68, %p69
      %p72 = scmp.ne.s32.totalorder %s55, %s71
      %p73 = scmp.eq.s32.totalorder %s26, 0
      %p74 = por %p72, %p73
      %s76 = sadd.s32 %s75, 1
      %p79 = scmp.eq.s32.totalorder %s20, 1
      %p80 = scmp.ne.s32.totalorder %s75, %s77
      %p81 = scmp.eq.s32.totalorder %s20, 0
      %p82 = por %p80, %p81
      %p83 = scmp.ne.s32.totalorder %s75, %s77
      %p84 = scmp.eq.s32.totalorder %s25, 1
      %p85 = por %p83, %p84
      %p86 = scmp.ne.s32.totalorder %s77, %s78
      %p87 = scmp.eq.s32.totalorder %s25, 0
      %p88 = por %p86, %p87
      %p89 = scmp.ne.s32.totalorder %s77, %s78
      %p90 = scmp.eq.s32.totalorder %s26, 1
      %p91 = por %p89, %p90
      %p93 = scmp.ne.s32.totalorder %s78, %s92
      %p94 = scmp.eq.s32.totalorder %s26, 0
      %p95 = por %p93, %p94
      %s97 = sadd.s32 %s96, 1
      %p100 = scmp.eq.s32.totalorder %s20, 1
      %p101 = scmp.ne.s32.totalorder %s96, %s98
      %p102 = scmp.eq.s32.totalorder %s20, 0
      %p103 = por %p101, %p102
      %p104 = scmp.ne.s32.totalorder %s96, %s98
      %p105 = scmp.eq.s32.totalorder %s25, 1
      %p106 = por %p104, %p105
      %p107 = scmp.ne.s32.totalorder %s98, %s99
      %p108 = scmp.eq.s32.totalorder %s25, 0
      %p109 = por %p107, %p108
      %p110 = scmp.ne.s32.totalorder %s98, %s99
      %p111 = scmp.eq.s32.totalorder %s26, 1
      %p112 = por %p110, %p111
      %p114 = scmp.ne.s32.totalorder %s99, %s113
      %p115 = scmp.eq.s32.totalorder %s26, 0
      %p116 = por %p114, %p115
      %s118 = sadd.s32 %s117, 1
      %p121 = scmp.eq.s32.totalorder %s20, 1
      %p122 = scmp.ne.s32.totalorder %s117, %s119
      %p123 = scmp.eq.s32.totalorder %s20, 0
      %p124 = por %p122, %p123
      %p125 = scmp.ne.s32.totalorder %s117, %s119
      %p126 = scmp.eq.s32.totalorder %s25, 1
      %p127 = por %p125, %p126
      %p128 = scmp.ne.s32.totalorder %s119, %s120
      %p129 = scmp.eq.s32.totalorder %s25, 0
      %p130 = por %p128, %p129
      %p131 = scmp.ne.s32.totalorder %s119, %s120
      %p132 = scmp.eq.s32.totalorder %s26, 1
      %p133 = por %p131, %p132
      %p135 = scmp.ne.s32.totalorder %s120, %s134
      %p136 = scmp.eq.s32.totalorder %s26, 0
      %p137 = por %p135, %p136
      %s139 = sadd.s32 %s138, 1
      %p142 = scmp.eq.s32.totalorder %s20, 1
      %p143 = scmp.ne.s32.totalorder %s138, %s140
      %p144 = scmp.eq.s32.totalorder %s20, 0
      %p145 = por %p143, %p144
      %p146 = scmp.ne.s32.totalorder %s138, %s140
      %p147 = scmp.eq.s32.totalorder %s25, 1
      %p148 = por %p146, %p147
      %p149 = scmp.ne.s32.totalorder %s140, %s141
      %p150 = scmp.eq.s32.totalorder %s25, 0
      %p151 = por %p149, %p150
      %p152 = scmp.ne.s32.totalorder %s140, %s141
      %p153 = scmp.eq.s32.totalorder %s26, 1
      %p154 = por %p152, %p153
      %p156 = scmp.ne.s32.totalorder %s141, %s155
      %p157 = scmp.eq.s32.totalorder %s26, 0
      %p158 = por %p156, %p157
      %s159 = ssub.s32 %s20, %s27
      %p160 = scmp.eq.s32.totalorder %s159, 0
      %s162 = sadd.s32 %s161, 1
      %s163 = scalar_select %p160, %s161, %s162
      %p166 = pneg %p160
      %p167 = scmp.eq.s32.totalorder %s20, 1
      %p168 = por %p166, %p167
      %p169 = scmp.ne.s32.totalorder %s161, %s164
      %p170 = scmp.eq.s32.totalorder %s20, 0
      %p171 = por %p169, %p170
      %p172 = scmp.ne.s32.totalorder %s161, %s164
      %p173 = scmp.eq.s32.totalorder %s25, 1
      %p174 = por %p172, %p173
      %p175 = scmp.ne.s32.totalorder %s164, %s165
      %p176 = scmp.eq.s32.totalorder %s25, 0
      %p177 = por %p175, %p176
      %p178 = scmp.ne.s32.totalorder %s164, %s165
      %p179 = scmp.eq.s32.totalorder %s26, 1
      %p180 = por %p178, %p179
      %p182 = scmp.ne.s32.totalorder %s165, %s181
      %p183 = scmp.eq.s32.totalorder %s26, 0
      %p184 = por %p182, %p183
      %p185 = scmp.le.s32.totalorder 1, %s20
      %p186 = scmp.lt.s32.totalorder %s20, 3
      %p187 = pnand %p185, %p186
      %p188 = pneg %p187
      // Predicated region
      $region9: #{tpu_custom_call.1} parent=5 // pred_check
        _
      $region10: #{tpu_custom_call.1} parent=5 // pred_check_branch
        %190 = sbr.rel (%p187) target = $region12
      $region11: #{tpu_custom_call.1} parent=5 // pred_region
        %s191 = ssub.s32 %s20, 1
        // Predicated region
        $region13: #{tpu_custom_call.1} parent=11 // pred_check
          %p192 = pneg %p41
        $region14: #{tpu_custom_call.1} parent=11 // pred_check_branch
          %194 = sbr.rel (%p192) target = $region16
        $region15: #{tpu_custom_call.1} parent=11 // pred_region
          %s196 = ssub.s32 16, 16
          %197 = vsyncadd [#allocation5], %s196
          %200 = dma.hbm_to_smem %s0, 16, [#allocation2], [#allocation5]
        $region16: #{tpu_custom_call.1} parent=11 // pred_fallthru
          _
        // Predicated region
        $region17: #{tpu_custom_call.1} parent=11 // pred_check
          %p201 = pneg %p88
        $region18: #{tpu_custom_call.1} parent=11 // pred_check_branch
          %203 = sbr.rel (%p201) target = $region20
        $region19: #{tpu_custom_call.1} parent=11 // pred_region
          %s205 = ssub.s32 2048, 2048
          %206 = vsyncadd [#allocation8], %s205
          %s207 = sshll.u32 [#allocation7], 4
          %s208 = int_to_ptr.vmem [resolvable:$true] %s207
          %213 = dma.hbm_to_vmem [thread:$0]  %s2, 2048, %s208, [#allocation8], 128, 128, 8
        $region20: #{tpu_custom_call.1} parent=11 // pred_fallthru
          _
        // Predicated region
        $region21: #{tpu_custom_call.1} parent=11 // pred_check
          %p214 = pneg %p109
        $region22: #{tpu_custom_call.1} parent=11 // pred_check_branch
          %216 = sbr.rel (%p214) target = $region24
        $region23: #{tpu_custom_call.1} parent=11 // pred_region
          _
        $region24: #{tpu_custom_call.1} parent=11 // pred_fallthru
          _
        // Predicated region
        $region25: #{tpu_custom_call.1} parent=11 // pred_check
          %p217 = pneg %p130
        $region26: #{tpu_custom_call.1} parent=11 // pred_check_branch
          %219 = sbr.rel (%p217) target = $region28
        $region27: #{tpu_custom_call.1} parent=11 // pred_region
          %s221 = ssub.s32 2048, 2048
          %222 = vsyncadd [#allocation8], %s221
          %s223 = sshll.u32 [#allocation9], 4
          %s224 = int_to_ptr.vmem [resolvable:$true] %s223
          %229 = dma.hbm_to_vmem [thread:$0]  %s4, 2048, %s224, [#allocation8], 64, 64, 4
        $region28: #{tpu_custom_call.1} parent=11 // pred_fallthru
          _
        // Predicated region
        $region29: #{tpu_custom_call.1} parent=11 // pred_check
          %p230 = pneg %p151
        $region30: #{tpu_custom_call.1} parent=11 // pred_check_branch
          %232 = sbr.rel (%p230) target = $region32
        $region31: #{tpu_custom_call.1} parent=11 // pred_region
          _
        $region32: #{tpu_custom_call.1} parent=11 // pred_fallthru
          _
      $region12: #{tpu_custom_call.1} parent=5 // pred_fallthru
        _
      %p233 = scmp.lt.s32.totalorder %s20, 2
      // Predicated region
      $region33: #{tpu_custom_call.1} parent=5 // pred_check
        %p234 = pneg %p233
      $region34: #{tpu_custom_call.1} parent=5 // pred_check_branch
        %236 = sbr.rel (%p234) target = $region36
      $region35: #{tpu_custom_call.1} parent=5 // pred_region
        // Predicated region
        $region37: #{tpu_custom_call.1} parent=35 // pred_check
          %p237 = pneg %p61
        $region38: #{tpu_custom_call.1} parent=35 // pred_check_branch
          %239 = sbr.rel (%p237) target = $region40
        $region39: #{tpu_custom_call.1} parent=35 // pred_region
          %s240 = sand.u32 %s51, 1
          %s241 = scalar_lea.sflag [#allocation3], %s240
          %s242 = sand.u32 %s51, 1
          %s243 = smul.addr %s242, 8
          %s244 = scalar_lea.vmem [#allocation6], %s243
          %s246 = ssub.s32 128, 128
          %247 = vsyncadd %s241, %s246
          %s248 = smul.addr %s20, 128
          %s249 = scalar_lea.hbm %s1, %s248
          %s251 = sshll.u32 %s244, 4
          %s252 = int_to_ptr.vmem [resolvable:$true] %s251
          %254 = dma.hbm_to_vmem [thread:$0]  %s249, 128, %s252, %s241
        $region40: #{tpu_custom_call.1} parent=35 // pred_fallthru
          _
      $region36: #{tpu_custom_call.1} parent=5 // pred_fallthru
        _
      %p255 = scmp.le.s32.totalorder 1, %s20
      %p256 = scmp.lt.s32.totalorder %s20, 3
      %p257 = pnand %p255, %p256
      %p258 = pneg %p257
      // Predicated region
      $region41: #{tpu_custom_call.1} parent=5 // pred_check
        _
      $region42: #{tpu_custom_call.1} parent=5 // pred_check_branch
        %260 = sbr.rel (%p257) target = $region44
      $region43: #{tpu_custom_call.1} parent=5 // pred_region
        %s261 = ssub.s32 %s20, 1
        // Predicated region
        $region45: #{tpu_custom_call.1} parent=43 // pred_check
          %p262 = pneg %p41
        $region46: #{tpu_custom_call.1} parent=43 // pred_check_branch
          %264 = sbr.rel (%p262) target = $region48
        $region47: #{tpu_custom_call.1} parent=43 // pred_region
          %265 = dma.done [#allocation5], 16
        $region48: #{tpu_custom_call.1} parent=43 // pred_fallthru
          _
        %s266 = sand.u32 %s54, 1
        %s267 = scalar_lea.sflag [#allocation3], %s266
        %s268 = sand.u32 %s54, 1
        %s269 = smul.addr %s268, 8
        %s270 = scalar_lea.vmem [#allocation6], %s269
        // Predicated region
        $region49: #{tpu_custom_call.1} parent=43 // pred_check
          %p271 = pneg %p67
        $region50: #{tpu_custom_call.1} parent=43 // pred_check_branch
          %273 = sbr.rel (%p271) target = $region52
        $region51: #{tpu_custom_call.1} parent=43 // pred_region
          %274 = dma.done %s267, 128
        $region52: #{tpu_custom_call.1} parent=43 // pred_fallthru
          _
        // Predicated region
        $region53: #{tpu_custom_call.1} parent=43 // pred_check
          %p275 = pneg %p88
        $region54: #{tpu_custom_call.1} parent=43 // pred_check_branch
          %277 = sbr.rel (%p275) target = $region56
        $region55: #{tpu_custom_call.1} parent=43 // pred_region
          %278 = dma.done [#allocation8], 2048
        $region56: #{tpu_custom_call.1} parent=43 // pred_fallthru
          _
        // Predicated region
        $region57: #{tpu_custom_call.1} parent=43 // pred_check
          %p279 = pneg %p130
        $region58: #{tpu_custom_call.1} parent=43 // pred_check_branch
          %281 = sbr.rel (%p279) target = $region60
        $region59: #{tpu_custom_call.1} parent=43 // pred_region
          %282 = dma.done [#allocation8], 2048
        $region60: #{tpu_custom_call.1} parent=43 // pred_fallthru
          _
        %283 = sfence
        %p284 = pneg %p41
        %p285 = pneg %p38
        %s286 = sand.u32 %s54, 1
        %s287 = scalar_lea.sflag [#allocation3], %s286
        %s288 = sand.u32 %s54, 1
        %s289 = smul.addr %s288, 8
        %s290 = scalar_lea.vmem [#allocation6], %s289
        %p291 = pneg %p67
        %p292 = pneg %p64
        %p293 = pneg %p88
        %p294 = pneg %p85
        %p295 = pneg %p109
        %p296 = pneg %p106
        %p297 = pneg %p130
        %p298 = pneg %p127
        %p299 = pneg %p151
        %p300 = pneg %p148
        %p301 = pneg %p177
        %p302 = pneg %p174
        %s303 = sand.u32 %s164, 1
        %s304 = scalar_lea.sflag [#allocation4], %s303
        %s305 = sand.u32 %s164, 1
        %s306 = smul.addr %s305, 8
        %s307 = scalar_lea.vmem [#allocation10], %s306
        %v309 = vld [vmem:[%s270] sm:$0xff]
        %v310 = vpack.c.bf16 %v309, %v309
        %v311 = vld [vmem:[#allocation7] sm:$0xff]
        %v312 = vld [vmem:[#allocation7 + $0x8] sm:$0xff]
        %v313 = vld [vmem:[#allocation7 + $0x10] sm:$0xff]
        %v314 = vld [vmem:[#allocation7 + $0x18] sm:$0xff]
        %v315 = vld [vmem:[#allocation7 + $0x20] sm:$0xff]
        %v316 = vld [vmem:[#allocation7 + $0x28] sm:$0xff]
        %v317 = vld [vmem:[#allocation7 + $0x30] sm:$0xff]
        %v318 = vld [vmem:[#allocation7 + $0x38] sm:$0xff]
        %v319 = vld [vmem:[#allocation7 + $0x40] sm:$0xff]
        %v320 = vld [vmem:[#allocation7 + $0x48] sm:$0xff]
        %v321 = vld [vmem:[#allocation7 + $0x50] sm:$0xff]
        %v322 = vld [vmem:[#allocation7 + $0x58] sm:$0xff]
        %v323 = vld [vmem:[#allocation7 + $0x60] sm:$0xff]
        %v324 = vld [vmem:[#allocation7 + $0x68] sm:$0xff]
        %v325 = vld [vmem:[#allocation7 + $0x70] sm:$0xff]
        %v326 = vld [vmem:[#allocation7 + $0x78] sm:$0xff]
        %v327 = vld [vmem:[%s3] sm:$0x3]
        %v329 = vlaneseq
        %v330 = vshrl.u32 %v329, 7
        %v331 = vsub.s32 0, %v330
        %v332 = vrot.slane %v327, %v331
        %v333 = vlaneseq
        %v334 = vshrl.u32 %v333, 7
        %v335 = vsub.s32 1, %v334
        %v336 = vrot.slane %v327, %v335
        %v355 = vunpack.c.l.b16 %v311
        %v356 = vunpack.c.h.b16 %v311
        %v357 = vunpack.c.l.b16 %v312
        %v358 = vunpack.c.h.b16 %v312
        %v359 = vunpack.c.l.b16 %v313
        %v360 = vunpack.c.h.b16 %v313
        %v361 = vunpack.c.l.b16 %v314
        %v362 = vunpack.c.h.b16 %v314
        %v363 = vunpack.c.l.b16 %v315
        %v364 = vunpack.c.h.b16 %v315
        %v365 = vunpack.c.l.b16 %v316
        %v366 = vunpack.c.h.b16 %v316
        %v367 = vunpack.c.l.b16 %v317
        %v368 = vunpack.c.h.b16 %v317
        %v369 = vunpack.c.l.b16 %v318
        %v370 = vunpack.c.h.b16 %v318
        %v371 = vunpack.c.l.b16 %v319
        %v372 = vunpack.c.h.b16 %v319
        %v373 = vunpack.c.l.b16 %v320
        %v374 = vunpack.c.h.b16 %v320
        %v375 = vunpack.c.l.b16 %v321
        %v376 = vunpack.c.h.b16 %v321
        %v377 = vunpack.c.l.b16 %v322
        %v378 = vunpack.c.h.b16 %v322
        %v379 = vunpack.c.l.b16 %v323
        %v380 = vunpack.c.h.b16 %v323
        %v381 = vunpack.c.l.b16 %v324
        %v382 = vunpack.c.h.b16 %v324
        %v383 = vunpack.c.l.b16 %v325
        %v384 = vunpack.c.h.b16 %v325
        %v385 = vunpack.c.l.b16 %v326
        %v386 = vunpack.c.h.b16 %v326
        %v387 = vpack.c.b16 %v357, %v355
        %v388 = vpack.c.b16 %v358, %v356
        %v389 = vpack.c.b16 %v361, %v359
        %v390 = vpack.c.b16 %v362, %v360
        %v391 = vpack.c.b16 %v365, %v363
        %v392 = vpack.c.b16 %v366, %v364
        %v393 = vpack.c.b16 %v369, %v367
        %v394 = vpack.c.b16 %v370, %v368
        %v395 = vpack.c.b16 %v373, %v371
        %v396 = vpack.c.b16 %v374, %v372
        %v397 = vpack.c.b16 %v377, %v375
        %v398 = vpack.c.b16 %v378, %v376
        %v399 = vpack.c.b16 %v381, %v379
        %v400 = vpack.c.b16 %v382, %v380
        %v401 = vpack.c.b16 %v385, %v383
        %v402 = vpack.c.b16 %v386, %v384
        %419 = vmatprep.subr.bf16.mxu0 %v402
        %420 = vmatpush1.bf16.msra.mxu0 %v401
        %421 = vmatprep.subr.bf16.mxu0 %v400
        %422 = vmatpush1.bf16.msra.mxu0 %v399
        %423 = vmatprep.subr.bf16.mxu0 %v398
        %424 = vmatpush1.bf16.msra.mxu0 %v397
        %425 = vmatprep.subr.bf16.mxu0 %v396
        %426 = vmatpush1.bf16.msra.mxu0 %v395
        %427 = vmatprep.subr.bf16.mxu0 %v394
        %428 = vmatpush1.bf16.msra.mxu0 %v393
        %429 = vmatprep.subr.bf16.mxu0 %v392
        %430 = vmatpush1.bf16.msra.mxu0 %v391
        %431 = vmatprep.subr.bf16.mxu0 %v390
        %432 = vmatpush1.bf16.msra.mxu0 %v389
        %433 = vmatprep.subr.bf16.mxu0 %v388
        %434 = vmatpush1.bf16.msra.mxu0 %v387
        %435 = vmatprep.subr.bf16.mxu0 0
        %436 = vmatpush2.bf16.msra.mxu0 0
        %437 = vmatprep.subr.bf16.mxu0 0
        %438 = vmatpush2.bf16.msra.mxu0 0
        %439 = vmatprep.subr.bf16.mxu0 0
        %440 = vmatpush2.bf16.msra.mxu0 0
        %441 = vmatprep.subr.bf16.mxu0 0
        %442 = vmatpush2.bf16.msra.mxu0 0
        %443 = vmatprep.subr.bf16.mxu0 0
        %444 = vmatpush2.bf16.msra.mxu0 0
        %445 = vmatprep.subr.bf16.mxu0 0
        %446 = vmatpush2.bf16.msra.mxu0 0
        %447 = vmatprep.subr.bf16.mxu0 0
        %448 = vmatpush2.bf16.msra.mxu0 0
        %449 = vmatprep.subr.bf16.mxu0 0
        %450 = vmatpush2.bf16.msra.mxu0 0
        %451 = vmatprep.mubr.bf16.mxu0 0
        %452 = vmatmul.mubr.bf16.gmra.mxu0 %v310
        %v453 = vpop.f32.mrf.mxu0
        %v454 = vadd.f32 %v332, %v453
        %v455 = vpop.f32.mrf.mxu0
        %v456 = vadd.f32 %v336, %v455
        %v457 = vpop.f32.mrf.mxu0
        %v458 = vpop.f32.mrf.mxu0
        %459 = vdwg.mxu0
        %v460 = vmax.f32 %v454, 0.0
        %v461 = vmax.f32 %v456, 0.0
        %v462 = vpack.c.bf16 %v460, %v460
        %v463 = vpack.c.bf16 %v461, %v461
        %v464 = vld [vmem:[#allocation9] sm:$0xf]
        %v465 = vld [vmem:[#allocation9 + $0x4] sm:$0xf]
        %v466 = vld [vmem:[#allocation9 + $0x8] sm:$0xf]
        %v467 = vld [vmem:[#allocation9 + $0xc] sm:$0xf]
        %v468 = vld [vmem:[#allocation9 + $0x10] sm:$0xf]
        %v469 = vld [vmem:[#allocation9 + $0x14] sm:$0xf]
        %v470 = vld [vmem:[#allocation9 + $0x18] sm:$0xf]
        %v471 = vld [vmem:[#allocation9 + $0x1c] sm:$0xf]
        %v472 = vld [vmem:[#allocation9 + $0x20] sm:$0xf]
        %v473 = vld [vmem:[#allocation9 + $0x24] sm:$0xf]
        %v474 = vld [vmem:[#allocation9 + $0x28] sm:$0xf]
        %v475 = vld [vmem:[#allocation9 + $0x2c] sm:$0xf]
        %v476 = vld [vmem:[#allocation9 + $0x30] sm:$0xf]
        %v477 = vld [vmem:[#allocation9 + $0x34] sm:$0xf]
        %v478 = vld [vmem:[#allocation9 + $0x38] sm:$0xf]
        %v479 = vld [vmem:[#allocation9 + $0x3c] sm:$0xf]
        %v480 = vld [vmem:[#allocation9 + $0x40] sm:$0xf]
        %v481 = vld [vmem:[#allocation9 + $0x44] sm:$0xf]
        %v482 = vld [vmem:[#allocation9 + $0x48] sm:$0xf]
        %v483 = vld [vmem:[#allocation9 + $0x4c] sm:$0xf]
        %v484 = vld [vmem:[#allocation9 + $0x50] sm:$0xf]
        %v485 = vld [vmem:[#allocation9 + $0x54] sm:$0xf]
        %v486 = vld [vmem:[#allocation9 + $0x58] sm:$0xf]
        %v487 = vld [vmem:[#allocation9 + $0x5c] sm:$0xf]
        %v488 = vld [vmem:[#allocation9 + $0x60] sm:$0xf]
        %v489 = vld [vmem:[#allocation9 + $0x64] sm:$0xf]
        %v490 = vld [vmem:[#allocation9 + $0x68] sm:$0xf]
        %v491 = vld [vmem:[#allocation9 + $0x6c] sm:$0xf]
        %v492 = vld [vmem:[#allocation9 + $0x70] sm:$0xf]
        %v493 = vld [vmem:[#allocation9 + $0x74] sm:$0xf]
        %v494 = vld [vmem:[#allocation9 + $0x78] sm:$0xf]
        %v495 = vld [vmem:[#allocation9 + $0x7c] sm:$0xf]
        %v496 = vld [vmem:[%s5] sm:$0x1]
        %v498 = vlaneseq
        %v499 = vshrl.u32 %v498, 7
        %v500 = vsub.s32 0, %v499
        %v501 = vrot.slane %v496, %v500
        %v535 = vunpack.c.l.b16 %v464
        %v536 = vunpack.c.l.b16 %v465
        %v537 = vunpack.c.l.b16 %v466
        %v538 = vunpack.c.l.b16 %v467
        %v539 = vunpack.c.l.b16 %v468
        %v540 = vunpack.c.l.b16 %v469
        %v541 = vunpack.c.l.b16 %v470
        %v542 = vunpack.c.l.b16 %v471
        %v543 = vunpack.c.l.b16 %v472
        %v544 = vunpack.c.l.b16 %v473
        %v545 = vunpack.c.l.b16 %v474
        %v546 = vunpack.c.l.b16 %v475
        %v547 = vunpack.c.l.b16 %v476
        %v548 = vunpack.c.l.b16 %v477
        %v549 = vunpack.c.l.b16 %v478
        %v550 = vunpack.c.l.b16 %v479
        %v551 = vunpack.c.l.b16 %v480
        %v552 = vunpack.c.l.b16 %v481
        %v553 = vunpack.c.l.b16 %v482
        %v554 = vunpack.c.l.b16 %v483
        %v555 = vunpack.c.l.b16 %v484
        %v556 = vunpack.c.l.b16 %v485
        %v557 = vunpack.c.l.b16 %v486
        %v558 = vunpack.c.l.b16 %v487
        %v559 = vunpack.c.l.b16 %v488
        %v560 = vunpack.c.l.b16 %v489
        %v561 = vunpack.c.l.b16 %v490
        %v562 = vunpack.c.l.b16 %v491
        %v563 = vunpack.c.l.b16 %v492
        %v564 = vunpack.c.l.b16 %v493
        %v565 = vunpack.c.l.b16 %v494
        %v566 = vunpack.c.l.b16 %v495
        %v567 = vpack.c.b16 %v536, %v535
        %v568 = vpack.c.b16 %v538, %v537
        %v569 = vpack.c.b16 %v540, %v539
        %v570 = vpack.c.b16 %v542, %v541
        %v571 = vpack.c.b16 %v544, %v543
        %v572 = vpack.c.b16 %v546, %v545
        %v573 = vpack.c.b16 %v548, %v547
        %v574 = vpack.c.b16 %v550, %v549
        %v575 = vpack.c.b16 %v552, %v551
        %v576 = vpack.c.b16 %v554, %v553
        %v577 = vpack.c.b16 %v556, %v555
        %v578 = vpack.c.b16 %v558, %v557
        %v579 = vpack.c.b16 %v560, %v559
        %v580 = vpack.c.b16 %v562, %v561
        %v581 = vpack.c.b16 %v564, %v563
        %v582 = vpack.c.b16 %v566, %v565
        %599 = vmatprep.subr.bf16.mxu0 0
        %600 = vmatpush1.bf16.msra.mxu0 %v574
        %601 = vmatprep.subr.bf16.mxu0 0
        %602 = vmatpush1.bf16.msra.mxu0 %v573
        %603 = vmatprep.subr.bf16.mxu0 0
        %604 = vmatpush1.bf16.msra.mxu0 %v572
        %605 = vmatprep.subr.bf16.mxu0 0
        %606 = vmatpush1.bf16.msra.mxu0 %v571
        %607 = vmatprep.subr.bf16.mxu0 0
        %608 = vmatpush1.bf16.msra.mxu0 %v570
        %609 = vmatprep.subr.bf16.mxu0 0
        %610 = vmatpush1.bf16.msra.mxu0 %v569
        %611 = vmatprep.subr.bf16.mxu0 0
        %612 = vmatpush1.bf16.msra.mxu0 %v568
        %613 = vmatprep.subr.bf16.mxu0 0
        %614 = vmatpush1.bf16.msra.mxu0 %v567
        %615 = vmatprep.subr.bf16.mxu0 0
        %616 = vmatpush2.bf16.msra.mxu0 %v582
        %617 = vmatprep.subr.bf16.mxu0 0
        %618 = vmatpush2.bf16.msra.mxu0 %v581
        %619 = vmatprep.subr.bf16.mxu0 0
        %620 = vmatpush2.bf16.msra.mxu0 %v580
        %621 = vmatprep.subr.bf16.mxu0 0
        %622 = vmatpush2.bf16.msra.mxu0 %v579
        %623 = vmatprep.subr.bf16.mxu0 0
        %624 = vmatpush2.bf16.msra.mxu0 %v578
        %625 = vmatprep.subr.bf16.mxu0 0
        %626 = vmatpush2.bf16.msra.mxu0 %v577
        %627 = vmatprep.subr.bf16.mxu0 0
        %628 = vmatpush2.bf16.msra.mxu0 %v576
        %629 = vmatprep.subr.bf16.mxu0 0
        %630 = vmatpush2.bf16.msra.mxu0 %v575
        %631 = vmatprep.mubr.bf16.mxu0 %v463
        %632 = vmatmul.mubr.bf16.gmra.mxu0 %v462
        %v633 = vpop.f32.mrf.mxu0
        %v634 = vadd.f32 %v501, %v633
        %v635 = vpop.f32.mrf.mxu0
        %v636 = vpop.f32.mrf.mxu0
        %v637 = vpop.f32.mrf.mxu0
        %638 = vdwg.mxu0
        %s639 = sld [smem:[#allocation2]]
        %s640 = sld [smem:[#allocation2 + $0x1]]
        %v641 = vstv %s639
        %v642 = vmul.f32 %v641, %v309
        %v643 = vadd.f32 %v642, %v634
        %v644 = vmul.f32 %v309, 0.5
        %v645 = vmul.f32 %v309, 0.044715
        %v646 = vmul.f32 %v645, %v309
        %v647 = vmul.f32 %v646, %v309
        %v648 = vadd.f32 %v309, %v647
        %v649 = vmul.f32 %v648, 0.7978846
        %v650 = vtanh.pop %v649
        %v651 = vadd.f32 %v650, 1.0
        %v652 = vmul.f32 %v644, %v651
        %v653 = vstv %s640
        %v654 = vmul.f32 %v653, %v652
        %v655 = vadd.f32 %v643, %v654
        %656 = vst [vmem:[%s307] sm:$0xff] %v655
        %s657 = sand.u32 %s164, 1
        %s658 = scalar_lea.sflag [#allocation4], %s657
        %s659 = sand.u32 %s164, 1
        %s660 = smul.addr %s659, 8
        %s661 = scalar_lea.vmem [#allocation10], %s660
        // Predicated region
        $region61: #{tpu_custom_call.1} parent=43 // pred_check
          %p662 = pneg %p174
        $region62: #{tpu_custom_call.1} parent=43 // pred_check_branch
          %664 = sbr.rel (%p662) target = $region64
        $region63: #{tpu_custom_call.1} parent=43 // pred_region
          %s666 = ssub.s32 128, 128
          %667 = vsyncadd %s658, %s666
          %s668 = smul.addr %s25, 128
          %s669 = scalar_lea.hbm %s6, %s668
          %s671 = sshll.u32 %s661, 4
          %s672 = int_to_ptr.vmem [resolvable:$true] %s671
          %674 = dma.vmem_to_hbm [thread:$0]  %s672, 128, %s669, %s658
        $region64: #{tpu_custom_call.1} parent=43 // pred_fallthru
          _
      $region44: #{tpu_custom_call.1} parent=5 // pred_fallthru
        _
      %p675 = scmp.le.s32.totalorder 2, %s20
      // Predicated region
      $region65: #{tpu_custom_call.1} parent=5 // pred_check
        %p676 = pneg %p675
      $region66: #{tpu_custom_call.1} parent=5 // pred_check_branch
        %678 = sbr.rel (%p676) target = $region68
      $region67: #{tpu_custom_call.1} parent=5 // pred_region
        %s679 = ssub.s32 %s20, 2
        // Predicated region
        $region69: #{tpu_custom_call.1} parent=67 // pred_check
          %p680 = pneg %p180
        $region70: #{tpu_custom_call.1} parent=67 // pred_check_branch
          %682 = sbr.rel (%p680) target = $region72
        $region71: #{tpu_custom_call.1} parent=67 // pred_region
          %s683 = sand.u32 %s165, 1
          %s684 = scalar_lea.sflag [#allocation4], %s683
          %s685 = sand.u32 %s165, 1
          %s686 = smul.addr %s685, 8
          %s687 = scalar_lea.vmem [#allocation10], %s686
          %688 = dma.done %s684, 128
        $region72: #{tpu_custom_call.1} parent=67 // pred_fallthru
          _
      $region68: #{tpu_custom_call.1} parent=5 // pred_fallthru
        _
    $region6: #{tpu_custom_call.1} parent=1 // loop_footer
      %s24 = sadd.s32 1, %s20
    $region7: #{tpu_custom_call.1} parent=1 // loop_footer_branch
      %19 = sbr.rel target = $region3
    $region8: #{tpu_custom_call.1} parent=1 // loop_exit
      _
    %689 = vsyncpa [#allocation3], 1
    %s690 = scalar_lea.sflag [#allocation3], 1
    %691 = vsyncpa %s690, 1
    %692 = vsyncpa [#allocation8], 1
    %693 = vsyncpa [#allocation4], 1
    %s694 = scalar_lea.sflag [#allocation4], 1
    %695 = vsyncpa %s694, 1
    %696 = vsyncpa [#allocation5], 1
    %s697 = scalar_lea.sflag [#allocation5], 1
    %698 = vsyncpa %s697, 1

</llo_original>
